<compile_context>
chip_gen: v7x
topology: tpu7x:2x2x1
jax: 0.10.0
libtpu: 0.0.40
codegen_flags: <defaults>
</compile_context>

<pallas_src>
import jax
import jax.numpy as jnp
from jax.experimental import pallas as pl
from jax.experimental.pallas import tpu as pltpu

# Matmul-operand dtype for weights (per-chip perf review). Gate math stays f32.
WEIGHT_DTYPE = jnp.bfloat16


# ------------------------------- Fused kernel --------------------------------

def _make_decoder_kernel(n_layers, hid_dim, batch):
    H, L, B = hid_dim, n_layers, batch

    def kernel(*refs):
        # refs:
        #   [0]               tok_ref   SMEM (T, B) i32   (scalar prefetch)
        #   [1]               emb_ref   VMEM (V, E) f32   (resident)
        #   [2]               h0_ref    VMEM (L, B, 2H) f32
        #   [3 + 6l : 9 + 6l] per layer: wih (Din,6H) bf16, whh_f (H,3H) bf16,
        #                                whh_b (H,3H) bf16, bih (1,6H) f32,
        #                                bhh_f (1,3H) f32,  bhh_b (1,3H) f32
        #   [3 + 6L]          fc_w2     (2H, V) bf16      (fc_w stacked twice)
        #   [4 + 6L]          fc_b      (1, V) f32
        #   [5 + 6L]          pred_ref  out block (1, B, V) f32
        #   [6 + 6L]          hid_ref   out (L, B, 2H) f32 (constant block)
        #   [7 + 6L]          h_st      VMEM scratch (L, B, 2H) f32
        # Per-direction gate column layout: [r | z | n] (width 3H); fused input
        # weights are [fwd_rzn | bwd_rzn] (width 6H).  NOTE: gate slices are not
        # 128-lane aligned for H < 64 (cheap at H=32, pad gate blocks if H scales).
        tok_ref, emb_ref, h0_ref = refs[0], refs[1], refs[2]
        layer_refs = refs[3:3 + 6 * L]
        fcw_ref, fcb_ref = refs[3 + 6 * L], refs[4 + 6 * L]
        pred_ref, hid_ref = refs[5 + 6 * L], refs[6 + 6 * L]
        h_st = refs[7 + 6 * L]

        t = pl.program_id(0)

        @pl.when(t == 0)
        def _():
            h_st[...] = h0_ref[...]            # load initial hidden once

        # In-kernel embedding gather: SMEM token ids -> VMEM table rows.
        x = jnp.concatenate(
            [emb_ref[pl.ds(tok_ref[t, b], 1), :] for b in range(B)], axis=0)  # (B, E)

        for l in range(L):
            (wih_ref, whhf_ref, whhb_ref,
             bih_ref, bhhf_ref, bhhb_ref) = layer_refs[6 * l: 6 * l + 6]

            h_prev = h_st[l]                                   # (B, 2H) = [h_f | h_b]
            hf, hb = h_prev[:, 0:H], h_prev[:, H:2 * H]

            # One wide input matmul (both directions, all 3 gates), plus two
            # dense per-direction hidden matmuls (no zero-padded block-diag).
            gx = jnp.dot(x.astype(wih_ref.dtype), wih_ref[...],
                         preferred_element_type=jnp.float32) + bih_ref[...]    # (B, 6H)
            ghf = jnp.dot(hf.astype(whhf_ref.dtype), whhf_ref[...],
                          preferred_element_type=jnp.float32) + bhhf_ref[...]  # (B, 3H)
            ghb = jnp.dot(hb.astype(whhb_ref.dtype), whhb_ref[...],
                          preferred_element_type=jnp.float32) + bhhb_ref[...]  # (B, 3H)

            def gru_dir(gxd, ghd, hd):
                r = jax.nn.sigmoid(gxd[:, 0:H] + ghd[:, 0:H])
                z = jax.nn.sigmoid(gxd[:, H:2 * H] + ghd[:, H:2 * H])
                n = jnp.tanh(gxd[:, 2 * H:3 * H] + r * ghd[:, 2 * H:3 * H])
                return (1.0 - z) * n + z * hd

            hf_new = gru_dir(gx[:, 0:3 * H], ghf, hf)
            hb_new = gru_dir(gx[:, 3 * H:6 * H], ghb, hb)
            h_new = jnp.concatenate([hf_new, hb_new], axis=-1)  # (B, 2H)

            h_st[l] = h_new
            x = h_new

        # fc_out with the fwd+bwd sum folded into a stacked (2H, V) weight.
        pred_ref[0] = (jnp.dot(x.astype(fcw_ref.dtype), fcw_ref[...],
                               preferred_element_type=jnp.float32)
                       + fcb_ref[...])                           # (B, V) lane-dense

        @pl.when(t == pl.num_programs(0) - 1)
        def _():
            hid_ref[...] = h_st[...]           # write hidden back once, at the end

    return kernel


# ------------------------------ Python wrappers --------------------------------

def _const_spec(shape):
    zeros = (0,) * len(shape)
    return pl.BlockSpec(shape, lambda *_, _z=zeros: _z)   # resident: same block ∀ t


def decoder_forward_steps(params, tokens, hidden):
    """Run T teacher-forced decode steps in ONE pallas_call.

    tokens: (T, B) int32; hidden: (2*n_layers, B, H) f32 (torch GRU layout).
    Returns (preds (T, B, output_dim), new_hidden (2*n_layers, B, H)).
    """
    layers = params["layers"]
    L = len(layers)
    twoH, V = params["fc_w2"].shape
    H = twoH // 2
    T, B = tokens.shape

    # torch layout (2L, B, H) -> kernel layout (L, B, 2H); done once per fused
    # multi-step call (amortized over T steps).
    h_in = hidden.reshape(L, 2, B, H).transpose(0, 2, 1, 3).reshape(L, B, 2 * H)

    flat, in_specs = [], []
    for arr in (params["embedding"], h_in):
        flat.append(arr); in_specs.append(_const_spec(arr.shape))
    for lp in layers:
        for k in ("wih", "whh_f", "whh_b", "bih", "bhh_f", "bhh_b"):
            flat.append(lp[k]); in_specs.append(_const_spec(lp[k].shape))
    for arr in (params["fc_w2"], params["fc_b"]):
        flat.append(arr); in_specs.append(_const_spec(arr.shape))

    kernel = _make_decoder_kernel(L, H, B)
    preds, hid_out = pl.pallas_call(
        kernel,
        out_shape=(
            jax.ShapeDtypeStruct((T, B, V), jnp.float32),
            jax.ShapeDtypeStruct((L, B, 2 * H), jnp.float32),
        ),
        grid_spec=pltpu.PrefetchScalarGridSpec(
            num_scalar_prefetch=1,            # tokens -> SMEM
            grid=(T,),                        # time axis, weights stay resident
            in_specs=in_specs,
            out_specs=(
                pl.BlockSpec((1, B, V), lambda t, tok: (t, 0, 0)),
                pl.BlockSpec((L, B, 2 * H), lambda t, tok: (0, 0, 0)),
            ),
            scratch_shapes=[pltpu.VMEM((L, B, 2 * H), jnp.float32)],
        ),
        compiler_params=pltpu.CompilerParams(
            dimension_semantics=("arbitrary",),      # sequential hidden carry
            vmem_limit_bytes=32 * 1024 * 1024),
    )(tokens, *flat)

    # Back to torch layout (n_layers * 2, B, H), index = layer*2 + direction.
    new_hidden = hid_out.reshape(L, B, 2, H).transpose(0, 2, 1, 3).reshape(2 * L, B, H)
    return preds, new_hidden


def decoder_forward(params, tokens, hidden):
    """Single-timestep forward == PyTorch Decoder.forward(input, hidden)."""
    preds, new_hidden = decoder_forward_steps(params, tokens[None, :], hidden)
    return preds[0], new_hidden


# --------------------- Parameter init (raw) and gate fusion -------------------

def init_raw_params(key, output_dim, emb_dim, hid_dim, n_layers):
    H = hid_dim
    k = float(H) ** -0.5
    keys = iter(jax.random.split(key, 24 * n_layers + 8))

    def uni(shape):
        return jax.random.uniform(next(keys), shape, jnp.float32, -k, k)

    def dir_params(din):
        return {
            "wir": uni((din, H)), "wiz": uni((din, H)), "win": uni((din, H)),
            "whr": uni((H, H)),   "whz": uni((H, H)),   "whn": uni((H, H)),
            "bir": uni((1, H)),   "biz": uni((1, H)),   "bin": uni((1, H)),
            "bhr": uni((1, H)),   "bhz": uni((1, H)),   "bhn": uni((1, H)),
        }

    layer_list = []
    for l in range(n_layers):
        din = emb_dim if l == 0 else 2 * H
        layer_list.append([dir_params(din), dir_params(din)])   # [fwd, bwd]

    return {
        "embedding": jax.random.normal(next(keys), (output_dim, emb_dim), jnp.float32),
        "layers": layer_list,
        "fc_w": uni((H, output_dim)),
        "fc_b": uni((1, output_dim)),
    }


def fuse_params(raw, weight_dtype=WEIGHT_DTYPE):
    """Fused weights: per-direction [r|z|n] gate columns, dense whh per direction,
    bf16 matmul weights, fc_w stacked to (2H, V) so the fwd+bwd sum folds into fc."""

    def fuse_dir(p):
        wih = jnp.concatenate([p["wir"], p["wiz"], p["win"]], axis=1)   # (Din, 3H)
        whh = jnp.concatenate([p["whr"], p["whz"], p["whn"]], axis=1)   # (H, 3H)
        bih = jnp.concatenate([p["bir"], p["biz"], p["bin"]], axis=1)   # (1, 3H)
        bhh = jnp.concatenate([p["bhr"], p["bhz"], p["bhn"]], axis=1)   # (1, 3H)
        return wih, whh, bih, bhh

    layers = []
    for (f, b) in raw["layers"]:
        wih_f, whh_f, bih_f, bhh_f = fuse_dir(f)
        wih_b, whh_b, bih_b, bhh_b = fuse_dir(b)
        layers.append({
            "wih": jnp.concatenate([wih_f, wih_b], axis=1).astype(weight_dtype),
            "whh_f": whh_f.astype(weight_dtype),
            "whh_b": whh_b.astype(weight_dtype),
            "bih": jnp.concatenate([bih_f, bih_b], axis=1),   # biases stay f32
            "bhh_f": bhh_f,
            "bhh_b": bhh_b,
        })

    return {
        "embedding": raw["embedding"],
        "layers": layers,
        "fc_w2": jnp.concatenate([raw["fc_w"], raw["fc_w"]], axis=0).astype(weight_dtype),
        "fc_b": raw["fc_b"],
    }


# ------------------------------ Pure-JAX references ----------------------------

def decoder_step_ref_f32(raw, tokens, hidden):
    """Exact torch semantics (f32 everywhere), single timestep."""
    H = raw["fc_w"].shape[0]
    x = raw["embedding"][tokens]
    new_h = []
    for l, (f, b) in enumerate(raw["layers"]):
        outs = []
        for d, p in enumerate((f, b)):
            h = hidden[2 * l + d]
            r = jax.nn.sigmoid(x @ p["wir"] + p["bir"] + h @ p["whr"] + p["bhr"])
            z = jax.nn.sigmoid(x @ p["wiz"] + p["biz"] + h @ p["whz"] + p["bhz"])
            n = jnp.tanh(x @ p["win"] + p["bin"] + r * (h @ p["whn"] + p["bhn"]))
            h_new = (1.0 - z) * n + z * h
            outs.append(h_new)
            new_h.append(h_new)
        x = jnp.concatenate(outs, axis=-1)
    out = x[:, :H] + x[:, H:]
    pred = out @ raw["fc_w"] + raw["fc_b"]
    return pred, jnp.stack(new_h, axis=0)


def decoder_steps_ref_f32(raw, tokens, hidden):
    preds = []
    for t in range(tokens.shape[0]):
        p, hidden = decoder_step_ref_f32(raw, tokens[t], hidden)
        preds.append(p)
    return jnp.stack(preds, axis=0), hidden


def decoder_steps_ref_fused(fused, tokens, hidden):
    """Pure-JAX mirror of the kernel math (same fused layout and bf16 cast points)."""
    layers = fused["layers"]
    L = len(layers)
    twoH = fused["fc_w2"].shape[0]
    H = twoH // 2
    T, B = tokens.shape
    mm = layers[0]["wih"].dtype
    h = hidden.reshape(L, 2, B, H).transpose(0, 2, 1, 3).reshape(L, B, 2 * H)
    preds = []
    for t in range(T):
        x = fused["embedding"][tokens[t]]
        new_h = []
        for l in range(L):
            p = layers[l]
            hp = h[l]
            hf, hb = hp[:, :H], hp[:, H:]
            gx = jnp.dot(x.astype(mm), p["wih"],
                         preferred_element_type=jnp.float32) + p["bih"]
            ghf = jnp.dot(hf.astype(mm), p["whh_f"],
                          preferred_element_type=jnp.float32) + p["bhh_f"]
            ghb = jnp.dot(hb.astype(mm), p["whh_b"],
                          preferred_element_type=jnp.float32) + p["bhh_b"]

            def gru_dir(gxd, ghd, hd):
                r = jax.nn.sigmoid(gxd[:, :H] + ghd[:, :H])
                z = jax.nn.sigmoid(gxd[:, H:2 * H] + ghd[:, H:2 * H])
                n = jnp.tanh(gxd[:, 2 * H:] + r * ghd[:, 2 * H:])
                return (1.0 - z) * n + z * hd

            hf_new = gru_dir(gx[:, :3 * H], ghf, hf)
            hb_new = gru_dir(gx[:, 3 * H:], ghb, hb)
            x = jnp.concatenate([hf_new, hb_new], axis=-1)
            new_h.append(x)
        h = jnp.stack(new_h, axis=0)
        preds.append(jnp.dot(x.astype(mm), fused["fc_w2"],
                             preferred_element_type=jnp.float32) + fused["fc_b"])
    new_hidden = h.reshape(L, B, 2, H).transpose(0, 2, 1, 3).reshape(2 * L, B, H)
    return jnp.stack(preds, axis=0), new_hidden


# ----------------------------------- Main --------------------------------------

if __name__ == "__main__":
    OUTPUT_DIM = 128      # vocab size == fc_out width (lane-dense output)
    EMB_DIM = 80
    HID_DIM = 32
    N_LAYERS = 2
    B = 8                 # >= 8 to fill vreg sublanes (perf review batching item)
    T = 8                 # decode steps fused into one pallas_call

    key = jax.random.PRNGKey(0)
    pkey, tkey, hkey = jax.random.split(key, 3)

    raw = init_raw_params(pkey, OUTPUT_DIM, EMB_DIM, HID_DIM, N_LAYERS)
    fused = fuse_params(raw)

    tokens = jax.random.randint(tkey, (T, B), 0, OUTPUT_DIM, dtype=jnp.int32)
    hidden0 = jax.random.normal(hkey, (2 * N_LAYERS, B, HID_DIM), jnp.float32)

    # --- single-timestep forward (== PyTorch Decoder.forward) ---
    step_fn = jax.jit(decoder_forward)
    pred1, hid1 = step_fn(fused, tokens[0], hidden0)
    pred1 = jax.block_until_ready(pred1)
    hid1 = jax.block_until_ready(hid1)
    assert pred1.shape == (B, OUTPUT_DIM), pred1.shape
    assert hid1.shape == (2 * N_LAYERS, B, HID_DIM), hid1.shape

    # --- fused multi-step (teacher-forced) forward ---
    steps_fn = jax.jit(decoder_forward_steps)
    preds, hidT = steps_fn(fused, tokens, hidden0)
    preds = jax.block_until_ready(preds)
    hidT = jax.block_until_ready(hidT)
    assert preds.shape == (T, B, OUTPUT_DIM), preds.shape
    assert hidT.shape == (2 * N_LAYERS, B, HID_DIM), hidT.shape

    # Step 0 of the fused run must match the single-step run.
    assert jnp.allclose(preds[0], pred1, rtol=1e-5, atol=1e-5), \
        float(jnp.max(jnp.abs(preds[0] - pred1)))

    # Tight parity vs. a pure-JAX reference with identical bf16 matmul casts.
    preds_ref, hidT_ref = decoder_steps_ref_fused(fused, tokens, hidden0)
    assert jnp.allclose(preds, preds_ref, rtol=2e-3, atol=2e-3), \
        float(jnp.max(jnp.abs(preds - preds_ref)))
    assert jnp.allclose(hidT, hidT_ref, rtol=2e-3, atol=2e-3), \
        float(jnp.max(jnp.abs(hidT - hidT_ref)))

    # Loose parity vs. the full-f32 torch-semantics reference (bf16 weights ->
    # ~1e-2 level drift over T steps is expected; see perf review).
    preds_f32, hidT_f32 = decoder_steps_ref_f32(raw, tokens, hidden0)
    assert jnp.allclose(preds, preds_f32, rtol=0.1, atol=0.15), \
        float(jnp.max(jnp.abs(preds - preds_f32)))
    assert jnp.allclose(hidT, hidT_f32, rtol=0.1, atol=0.15), \
        float(jnp.max(jnp.abs(hidT - hidT_f32)))

    print("KERNEL_OK")
</pallas_src>

<mosaic_0001>
module attributes {stable_mosaic.version = 11 : i64} {
  func.func @kernel(%arg0: i32, %arg1: memref<1x8xi32, #tpu.memory_space<smem>>, %arg2: memref<128x80xf32, #tpu.memory_space<vmem>>, %arg3: memref<2x8x64xf32, #tpu.memory_space<vmem>>, %arg4: memref<80x192xbf16, #tpu.memory_space<vmem>>, %arg5: memref<32x96xbf16, #tpu.memory_space<vmem>>, %arg6: memref<32x96xbf16, #tpu.memory_space<vmem>>, %arg7: memref<1x192xf32, #tpu.memory_space<vmem>>, %arg8: memref<1x96xf32, #tpu.memory_space<vmem>>, %arg9: memref<1x96xf32, #tpu.memory_space<vmem>>, %arg10: memref<64x192xbf16, #tpu.memory_space<vmem>>, %arg11: memref<32x96xbf16, #tpu.memory_space<vmem>>, %arg12: memref<32x96xbf16, #tpu.memory_space<vmem>>, %arg13: memref<1x192xf32, #tpu.memory_space<vmem>>, %arg14: memref<1x96xf32, #tpu.memory_space<vmem>>, %arg15: memref<1x96xf32, #tpu.memory_space<vmem>>, %arg16: memref<64x128xbf16, #tpu.memory_space<vmem>>, %arg17: memref<1x128xf32, #tpu.memory_space<vmem>>, %arg18: memref<1x8x128xf32, #tpu.memory_space<vmem>>, %arg19: memref<2x8x64xf32, #tpu.memory_space<vmem>>, %arg20: memref<2x8x64xf32, #tpu.memory_space<vmem>>) attributes {dimension_semantics = [#tpu.dimension_semantics<arbitrary>], iteration_bounds = array<i64: 1>, scalar_prefetch = 1 : i64, scratch_operands = 1 : i64, tpu.core_type = #tpu.core_type<tc>, window_params = [{pipeline_mode = #tpu.pipeline_mode<synchronous>, transform_indices = @transform_0, window_bounds = array<i64: 128, 80>}, {pipeline_mode = #tpu.pipeline_mode<synchronous>, transform_indices = @transform_1, window_bounds = array<i64: 2, 8, 64>}, {pipeline_mode = #tpu.pipeline_mode<synchronous>, transform_indices = @transform_2, window_bounds = array<i64: 80, 192>}, {pipeline_mode = #tpu.pipeline_mode<synchronous>, transform_indices = @transform_3, window_bounds = array<i64: 32, 96>}, {pipeline_mode = #tpu.pipeline_mode<synchronous>, transform_indices = @transform_4, window_bounds = array<i64: 32, 96>}, {pipeline_mode = #tpu.pipeline_mode<synchronous>, transform_indices = @transform_5, window_bounds = array<i64: 1, 192>}, {pipeline_mode = #tpu.pipeline_mode<synchronous>, transform_indices = @transform_6, window_bounds = array<i64: 1, 96>}, {pipeline_mode = #tpu.pipeline_mode<synchronous>, transform_indices = @transform_7, window_bounds = array<i64: 1, 96>}, {pipeline_mode = #tpu.pipeline_mode<synchronous>, transform_indices = @transform_8, window_bounds = array<i64: 64, 192>}, {pipeline_mode = #tpu.pipeline_mode<synchronous>, transform_indices = @transform_9, window_bounds = array<i64: 32, 96>}, {pipeline_mode = #tpu.pipeline_mode<synchronous>, transform_indices = @transform_10, window_bounds = array<i64: 32, 96>}, {pipeline_mode = #tpu.pipeline_mode<synchronous>, transform_indices = @transform_11, window_bounds = array<i64: 1, 192>}, {pipeline_mode = #tpu.pipeline_mode<synchronous>, transform_indices = @transform_12, window_bounds = array<i64: 1, 96>}, {pipeline_mode = #tpu.pipeline_mode<synchronous>, transform_indices = @transform_13, window_bounds = array<i64: 1, 96>}, {pipeline_mode = #tpu.pipeline_mode<synchronous>, transform_indices = @transform_14, window_bounds = array<i64: 64, 128>}, {pipeline_mode = #tpu.pipeline_mode<synchronous>, transform_indices = @transform_15, window_bounds = array<i64: 1, 128>}, {transform_indices = @transform_16, window_bounds = array<i64: 1, 8, 128>}, {pipeline_mode = #tpu.pipeline_mode<synchronous>, transform_indices = @transform_17, window_bounds = array<i64: 2, 8, 64>}]} {
    %c0_i32 = arith.constant 0 : i32
    %0 = arith.cmpi eq, %arg0, %c0_i32 : i32
    %1 = arith.extui %0 : i1 to i32
    %c0_i32_0 = arith.constant 0 : i32
    %2 = arith.cmpi ne, %1, %c0_i32_0 : i32
    scf.if %2 {
      %c0_72 = arith.constant 0 : index
      %c0_73 = arith.constant 0 : index
      %c0_74 = arith.constant 0 : index
      %208 = vector.load %arg3[%c0_72, %c0_73, %c0_74] : memref<2x8x64xf32, #tpu.memory_space<vmem>>, vector<2x8x64xf32>
      %c0_75 = arith.constant 0 : index
      %c0_76 = arith.constant 0 : index
      %c0_77 = arith.constant 0 : index
      %209 = vector.load %arg20[%c0_75, %c0_76, %c0_77] : memref<2x8x64xf32, #tpu.memory_space<vmem>>, vector<2x8x64xf32>
      tpu.vector_store %arg20[%c0_75, %c0_76, %c0_77], %208 {strides = array<i32>} : memref<2x8x64xf32, #tpu.memory_space<vmem>>, vector<2x8x64xf32>,
    } else {
    }
    %3 = arith.index_cast %arg0 : i32 to index
    %c0 = arith.constant 0 : index
    %4 = memref.load %arg1[%3, %c0] : memref<1x8xi32, #tpu.memory_space<smem>>
    %5 = arith.index_cast %4 : i32 to index
    %c0_1 = arith.constant 0 : index
    %6 = vector.load %arg2[%5, %c0_1] : memref<128x80xf32, #tpu.memory_space<vmem>>, vector<1x80xf32>
    %7 = arith.index_cast %arg0 : i32 to index
    %c1 = arith.constant 1 : index
    %8 = memref.load %arg1[%7, %c1] : memref<1x8xi32, #tpu.memory_space<smem>>
    %9 = arith.index_cast %8 : i32 to index
    %c0_2 = arith.constant 0 : index
    %10 = vector.load %arg2[%9, %c0_2] : memref<128x80xf32, #tpu.memory_space<vmem>>, vector<1x80xf32>
    %11 = arith.index_cast %arg0 : i32 to index
    %c2 = arith.constant 2 : index
    %12 = memref.load %arg1[%11, %c2] : memref<1x8xi32, #tpu.memory_space<smem>>
    %13 = arith.index_cast %12 : i32 to index
    %c0_3 = arith.constant 0 : index
    %14 = vector.load %arg2[%13, %c0_3] : memref<128x80xf32, #tpu.memory_space<vmem>>, vector<1x80xf32>
    %15 = arith.index_cast %arg0 : i32 to index
    %c3 = arith.constant 3 : index
    %16 = memref.load %arg1[%15, %c3] : memref<1x8xi32, #tpu.memory_space<smem>>
    %17 = arith.index_cast %16 : i32 to index
    %c0_4 = arith.constant 0 : index
    %18 = vector.load %arg2[%17, %c0_4] : memref<128x80xf32, #tpu.memory_space<vmem>>, vector<1x80xf32>
    %19 = arith.index_cast %arg0 : i32 to index
    %c4 = arith.constant 4 : index
    %20 = memref.load %arg1[%19, %c4] : memref<1x8xi32, #tpu.memory_space<smem>>
    %21 = arith.index_cast %20 : i32 to index
    %c0_5 = arith.constant 0 : index
    %22 = vector.load %arg2[%21, %c0_5] : memref<128x80xf32, #tpu.memory_space<vmem>>, vector<1x80xf32>
    %23 = arith.index_cast %arg0 : i32 to index
    %c5 = arith.constant 5 : index
    %24 = memref.load %arg1[%23, %c5] : memref<1x8xi32, #tpu.memory_space<smem>>
    %25 = arith.index_cast %24 : i32 to index
    %c0_6 = arith.constant 0 : index
    %26 = vector.load %arg2[%25, %c0_6] : memref<128x80xf32, #tpu.memory_space<vmem>>, vector<1x80xf32>
    %27 = arith.index_cast %arg0 : i32 to index
    %c6 = arith.constant 6 : index
    %28 = memref.load %arg1[%27, %c6] : memref<1x8xi32, #tpu.memory_space<smem>>
    %29 = arith.index_cast %28 : i32 to index
    %c0_7 = arith.constant 0 : index
    %30 = vector.load %arg2[%29, %c0_7] : memref<128x80xf32, #tpu.memory_space<vmem>>, vector<1x80xf32>
    %31 = arith.index_cast %arg0 : i32 to index
    %c7 = arith.constant 7 : index
    %32 = memref.load %arg1[%31, %c7] : memref<1x8xi32, #tpu.memory_space<smem>>
    %33 = arith.index_cast %32 : i32 to index
    %c0_8 = arith.constant 0 : index
    %34 = vector.load %arg2[%33, %c0_8] : memref<128x80xf32, #tpu.memory_space<vmem>>, vector<1x80xf32>
    %35 = tpu.concatenate %6, %10, %14, %18, %22, %26, %30, %34 in 0 : vector<1x80xf32>, vector<1x80xf32>, vector<1x80xf32>, vector<1x80xf32>, vector<1x80xf32>, vector<1x80xf32>, vector<1x80xf32>, vector<1x80xf32> -> vector<8x80xf32>
    %c0_9 = arith.constant 0 : index
    %c0_10 = arith.constant 0 : index
    %c0_11 = arith.constant 0 : index
    %36 = vector.load %arg20[%c0_9, %c0_10, %c0_11] : memref<2x8x64xf32, #tpu.memory_space<vmem>>, vector<1x8x64xf32>
    %37 = vector.shape_cast %36 : vector<1x8x64xf32> to vector<8x64xf32>
    %38 = vector.extract_strided_slice %37 {offsets = [0, 0], sizes = [8, 32], strides = [1, 1]} : vector<8x64xf32> to vector<8x32xf32>
    %39 = vector.extract_strided_slice %37 {offsets = [0, 32], sizes = [8, 32], strides = [1, 1]} : vector<8x64xf32> to vector<8x32xf32>
    %40 = arith.truncf %35 : vector<8x80xf32> to vector<8x80xbf16>
    %c0_12 = arith.constant 0 : index
    %c0_13 = arith.constant 0 : index
    %41 = vector.load %arg4[%c0_12, %c0_13] : memref<80x192xbf16, #tpu.memory_space<vmem>>, vector<80x192xbf16>
    %cst = arith.constant dense<0.000000e+00> : vector<8x192xf32>
    %42 = tpu.matmul %40, %41, %cst {dimension_numbers = #tpu.dot_dimension_numbers<[1], [0], [0], [1], [0, 0, 1, 1], [], []>} : vector<8x80xbf16>, vector<80x192xbf16>, vector<8x192xf32> -> vector<8x192xf32>
    %c0_14 = arith.constant 0 : index
    %c0_15 = arith.constant 0 : index
    %43 = vector.load %arg7[%c0_14, %c0_15] : memref<1x192xf32, #tpu.memory_space<vmem>>, vector<1x192xf32>
    %44 = vector.broadcast %43 : vector<1x192xf32> to vector<8x192xf32>
    %45 = arith.addf %42, %44 : vector<8x192xf32>
    %46 = arith.truncf %38 : vector<8x32xf32> to vector<8x32xbf16>
    %c0_16 = arith.constant 0 : index
    %c0_17 = arith.constant 0 : index
    %47 = vector.load %arg5[%c0_16, %c0_17] : memref<32x96xbf16, #tpu.memory_space<vmem>>, vector<32x96xbf16>
    %cst_18 = arith.constant dense<0.000000e+00> : vector<8x96xf32>
    %48 = tpu.matmul %46, %47, %cst_18 {dimension_numbers = #tpu.dot_dimension_numbers<[1], [0], [0], [1], [0, 0, 1, 1], [], []>} : vector<8x32xbf16>, vector<32x96xbf16>, vector<8x96xf32> -> vector<8x96xf32>
    %c0_19 = arith.constant 0 : index
    %c0_20 = arith.constant 0 : index
    %49 = vector.load %arg8[%c0_19, %c0_20] : memref<1x96xf32, #tpu.memory_space<vmem>>, vector<1x96xf32>
    %50 = vector.broadcast %49 : vector<1x96xf32> to vector<8x96xf32>
    %51 = arith.addf %48, %50 : vector<8x96xf32>
    %52 = arith.truncf %39 : vector<8x32xf32> to vector<8x32xbf16>
    %c0_21 = arith.constant 0 : index
    %c0_22 = arith.constant 0 : index
    %53 = vector.load %arg6[%c0_21, %c0_22] : memref<32x96xbf16, #tpu.memory_space<vmem>>, vector<32x96xbf16>
    %cst_23 = arith.constant dense<0.000000e+00> : vector<8x96xf32>
    %54 = tpu.matmul %52, %53, %cst_23 {dimension_numbers = #tpu.dot_dimension_numbers<[1], [0], [0], [1], [0, 0, 1, 1], [], []>} : vector<8x32xbf16>, vector<32x96xbf16>, vector<8x96xf32> -> vector<8x96xf32>
    %c0_24 = arith.constant 0 : index
    %c0_25 = arith.constant 0 : index
    %55 = vector.load %arg9[%c0_24, %c0_25] : memref<1x96xf32, #tpu.memory_space<vmem>>, vector<1x96xf32>
    %56 = vector.broadcast %55 : vector<1x96xf32> to vector<8x96xf32>
    %57 = arith.addf %54, %56 : vector<8x96xf32>
    %58 = vector.extract_strided_slice %45 {offsets = [0, 0], sizes = [8, 96], strides = [1, 1]} : vector<8x192xf32> to vector<8x96xf32>
    %59 = vector.extract_strided_slice %58 {offsets = [0, 0], sizes = [8, 32], strides = [1, 1]} : vector<8x96xf32> to vector<8x32xf32>
    %60 = vector.extract_strided_slice %51 {offsets = [0, 0], sizes = [8, 32], strides = [1, 1]} : vector<8x96xf32> to vector<8x32xf32>
    %61 = arith.addf %59, %60 : vector<8x32xf32>
    %62 = arith.negf %61 : vector<8x32xf32>
    %63 = math.exp %62 : vector<8x32xf32>
    %cst_26 = arith.constant 1.000000e+00 : f32
    %64 = vector.broadcast %cst_26 : f32 to vector<8x32xf32>
    %65 = arith.addf %64, %63 : vector<8x32xf32>
    %66 = arith.divf %64, %65 : vector<8x32xf32>
    %67 = vector.extract_strided_slice %58 {offsets = [0, 32], sizes = [8, 32], strides = [1, 1]} : vector<8x96xf32> to vector<8x32xf32>
    %68 = vector.extract_strided_slice %51 {offsets = [0, 32], sizes = [8, 32], strides = [1, 1]} : vector<8x96xf32> to vector<8x32xf32>
    %69 = arith.addf %67, %68 : vector<8x32xf32>
    %70 = arith.negf %69 : vector<8x32xf32>
    %71 = math.exp %70 : vector<8x32xf32>
    %cst_27 = arith.constant 1.000000e+00 : f32
    %72 = vector.broadcast %cst_27 : f32 to vector<8x32xf32>
    %73 = arith.addf %72, %71 : vector<8x32xf32>
    %74 = arith.divf %72, %73 : vector<8x32xf32>
    %75 = vector.extract_strided_slice %58 {offsets = [0, 64], sizes = [8, 32], strides = [1, 1]} : vector<8x96xf32> to vector<8x32xf32>
    %76 = vector.extract_strided_slice %51 {offsets = [0, 64], sizes = [8, 32], strides = [1, 1]} : vector<8x96xf32> to vector<8x32xf32>
    %77 = arith.mulf %66, %76 : vector<8x32xf32>
    %78 = arith.addf %75, %77 : vector<8x32xf32>
    %79 = math.tanh %78 : vector<8x32xf32>
    %cst_28 = arith.constant 1.000000e+00 : f32
    %80 = vector.broadcast %cst_28 : f32 to vector<8x32xf32>
    %81 = arith.subf %80, %74 : vector<8x32xf32>
    %82 = arith.mulf %81, %79 : vector<8x32xf32>
    %83 = arith.mulf %74, %38 : vector<8x32xf32>
    %84 = arith.addf %82, %83 : vector<8x32xf32>
    %85 = vector.extract_strided_slice %45 {offsets = [0, 96], sizes = [8, 96], strides = [1, 1]} : vector<8x192xf32> to vector<8x96xf32>
    %86 = vector.extract_strided_slice %85 {offsets = [0, 0], sizes = [8, 32], strides = [1, 1]} : vector<8x96xf32> to vector<8x32xf32>
    %87 = vector.extract_strided_slice %57 {offsets = [0, 0], sizes = [8, 32], strides = [1, 1]} : vector<8x96xf32> to vector<8x32xf32>
    %88 = arith.addf %86, %87 : vector<8x32xf32>
    %89 = arith.negf %88 : vector<8x32xf32>
    %90 = math.exp %89 : vector<8x32xf32>
    %cst_29 = arith.constant 1.000000e+00 : f32
    %91 = vector.broadcast %cst_29 : f32 to vector<8x32xf32>
    %92 = arith.addf %91, %90 : vector<8x32xf32>
    %93 = arith.divf %91, %92 : vector<8x32xf32>
    %94 = vector.extract_strided_slice %85 {offsets = [0, 32], sizes = [8, 32], strides = [1, 1]} : vector<8x96xf32> to vector<8x32xf32>
    %95 = vector.extract_strided_slice %57 {offsets = [0, 32], sizes = [8, 32], strides = [1, 1]} : vector<8x96xf32> to vector<8x32xf32>
    %96 = arith.addf %94, %95 : vector<8x32xf32>
    %97 = arith.negf %96 : vector<8x32xf32>
    %98 = math.exp %97 : vector<8x32xf32>
    %cst_30 = arith.constant 1.000000e+00 : f32
    %99 = vector.broadcast %cst_30 : f32 to vector<8x32xf32>
    %100 = arith.addf %99, %98 : vector<8x32xf32>
    %101 = arith.divf %99, %100 : vector<8x32xf32>
    %102 = vector.extract_strided_slice %85 {offsets = [0, 64], sizes = [8, 32], strides = [1, 1]} : vector<8x96xf32> to vector<8x32xf32>
    %103 = vector.extract_strided_slice %57 {offsets = [0, 64], sizes = [8, 32], strides = [1, 1]} : vector<8x96xf32> to vector<8x32xf32>
    %104 = arith.mulf %93, %103 : vector<8x32xf32>
    %105 = arith.addf %102, %104 : vector<8x32xf32>
    %106 = math.tanh %105 : vector<8x32xf32>
    %cst_31 = arith.constant 1.000000e+00 : f32
    %107 = vector.broadcast %cst_31 : f32 to vector<8x32xf32>
    %108 = arith.subf %107, %101 : vector<8x32xf32>
    %109 = arith.mulf %108, %106 : vector<8x32xf32>
    %110 = arith.mulf %101, %39 : vector<8x32xf32>
    %111 = arith.addf %109, %110 : vector<8x32xf32>
    %112 = tpu.concatenate %84, %111 in 1 : vector<8x32xf32>, vector<8x32xf32> -> vector<8x64xf32>
    %c0_32 = arith.constant 0 : index
    %c0_33 = arith.constant 0 : index
    %c0_34 = arith.constant 0 : index
    %113 = vector.load %arg20[%c0_32, %c0_33, %c0_34] : memref<2x8x64xf32, #tpu.memory_space<vmem>>, vector<1x8x64xf32>
    %114 = vector.shape_cast %113 : vector<1x8x64xf32> to vector<8x64xf32>
    %115 = vector.shape_cast %112 : vector<8x64xf32> to vector<1x8x64xf32>
    tpu.vector_store %arg20[%c0_32, %c0_33, %c0_34], %115 {strides = array<i32>} : memref<2x8x64xf32, #tpu.memory_space<vmem>>, vector<1x8x64xf32>,
    %c1_35 = arith.constant 1 : index
    %c0_36 = arith.constant 0 : index
    %c0_37 = arith.constant 0 : index
    %116 = vector.load %arg20[%c1_35, %c0_36, %c0_37] : memref<2x8x64xf32, #tpu.memory_space<vmem>>, vector<1x8x64xf32>
    %117 = vector.shape_cast %116 : vector<1x8x64xf32> to vector<8x64xf32>
    %118 = vector.extract_strided_slice %117 {offsets = [0, 0], sizes = [8, 32], strides = [1, 1]} : vector<8x64xf32> to vector<8x32xf32>
    %119 = vector.extract_strided_slice %117 {offsets = [0, 32], sizes = [8, 32], strides = [1, 1]} : vector<8x64xf32> to vector<8x32xf32>
    %120 = arith.truncf %112 : vector<8x64xf32> to vector<8x64xbf16>
    %c0_38 = arith.constant 0 : index
    %c0_39 = arith.constant 0 : index
    %121 = vector.load %arg10[%c0_38, %c0_39] : memref<64x192xbf16, #tpu.memory_space<vmem>>, vector<64x192xbf16>
    %cst_40 = arith.constant dense<0.000000e+00> : vector<8x192xf32>
    %122 = tpu.matmul %120, %121, %cst_40 {dimension_numbers = #tpu.dot_dimension_numbers<[1], [0], [0], [1], [0, 0, 1, 1], [], []>} : vector<8x64xbf16>, vector<64x192xbf16>, vector<8x192xf32> -> vector<8x192xf32>
    %c0_41 = arith.constant 0 : index
    %c0_42 = arith.constant 0 : index
    %123 = vector.load %arg13[%c0_41, %c0_42] : memref<1x192xf32, #tpu.memory_space<vmem>>, vector<1x192xf32>
    %124 = vector.broadcast %123 : vector<1x192xf32> to vector<8x192xf32>
    %125 = arith.addf %122, %124 : vector<8x192xf32>
    %126 = arith.truncf %118 : vector<8x32xf32> to vector<8x32xbf16>
    %c0_43 = arith.constant 0 : index
    %c0_44 = arith.constant 0 : index
    %127 = vector.load %arg11[%c0_43, %c0_44] : memref<32x96xbf16, #tpu.memory_space<vmem>>, vector<32x96xbf16>
    %cst_45 = arith.constant dense<0.000000e+00> : vector<8x96xf32>
    %128 = tpu.matmul %126, %127, %cst_45 {dimension_numbers = #tpu.dot_dimension_numbers<[1], [0], [0], [1], [0, 0, 1, 1], [], []>} : vector<8x32xbf16>, vector<32x96xbf16>, vector<8x96xf32> -> vector<8x96xf32>
    %c0_46 = arith.constant 0 : index
    %c0_47 = arith.constant 0 : index
    %129 = vector.load %arg14[%c0_46, %c0_47] : memref<1x96xf32, #tpu.memory_space<vmem>>, vector<1x96xf32>
    %130 = vector.broadcast %129 : vector<1x96xf32> to vector<8x96xf32>
    %131 = arith.addf %128, %130 : vector<8x96xf32>
    %132 = arith.truncf %119 : vector<8x32xf32> to vector<8x32xbf16>
    %c0_48 = arith.constant 0 : index
    %c0_49 = arith.constant 0 : index
    %133 = vector.load %arg12[%c0_48, %c0_49] : memref<32x96xbf16, #tpu.memory_space<vmem>>, vector<32x96xbf16>
    %cst_50 = arith.constant dense<0.000000e+00> : vector<8x96xf32>
    %134 = tpu.matmul %132, %133, %cst_50 {dimension_numbers = #tpu.dot_dimension_numbers<[1], [0], [0], [1], [0, 0, 1, 1], [], []>} : vector<8x32xbf16>, vector<32x96xbf16>, vector<8x96xf32> -> vector<8x96xf32>
    %c0_51 = arith.constant 0 : index
    %c0_52 = arith.constant 0 : index
    %135 = vector.load %arg15[%c0_51, %c0_52] : memref<1x96xf32, #tpu.memory_space<vmem>>, vector<1x96xf32>
    %136 = vector.broadcast %135 : vector<1x96xf32> to vector<8x96xf32>
    %137 = arith.addf %134, %136 : vector<8x96xf32>
    %138 = vector.extract_strided_slice %125 {offsets = [0, 0], sizes = [8, 96], strides = [1, 1]} : vector<8x192xf32> to vector<8x96xf32>
    %139 = vector.extract_strided_slice %138 {offsets = [0, 0], sizes = [8, 32], strides = [1, 1]} : vector<8x96xf32> to vector<8x32xf32>
    %140 = vector.extract_strided_slice %131 {offsets = [0, 0], sizes = [8, 32], strides = [1, 1]} : vector<8x96xf32> to vector<8x32xf32>
    %141 = arith.addf %139, %140 : vector<8x32xf32>
    %142 = arith.negf %141 : vector<8x32xf32>
    %143 = math.exp %142 : vector<8x32xf32>
    %cst_53 = arith.constant 1.000000e+00 : f32
    %144 = vector.broadcast %cst_53 : f32 to vector<8x32xf32>
    %145 = arith.addf %144, %143 : vector<8x32xf32>
    %146 = arith.divf %144, %145 : vector<8x32xf32>
    %147 = vector.extract_strided_slice %138 {offsets = [0, 32], sizes = [8, 32], strides = [1, 1]} : vector<8x96xf32> to vector<8x32xf32>
    %148 = vector.extract_strided_slice %131 {offsets = [0, 32], sizes = [8, 32], strides = [1, 1]} : vector<8x96xf32> to vector<8x32xf32>
    %149 = arith.addf %147, %148 : vector<8x32xf32>
    %150 = arith.negf %149 : vector<8x32xf32>
    %151 = math.exp %150 : vector<8x32xf32>
    %cst_54 = arith.constant 1.000000e+00 : f32
    %152 = vector.broadcast %cst_54 : f32 to vector<8x32xf32>
    %153 = arith.addf %152, %151 : vector<8x32xf32>
    %154 = arith.divf %152, %153 : vector<8x32xf32>
    %155 = vector.extract_strided_slice %138 {offsets = [0, 64], sizes = [8, 32], strides = [1, 1]} : vector<8x96xf32> to vector<8x32xf32>
    %156 = vector.extract_strided_slice %131 {offsets = [0, 64], sizes = [8, 32], strides = [1, 1]} : vector<8x96xf32> to vector<8x32xf32>
    %157 = arith.mulf %146, %156 : vector<8x32xf32>
    %158 = arith.addf %155, %157 : vector<8x32xf32>
    %159 = math.tanh %158 : vector<8x32xf32>
    %cst_55 = arith.constant 1.000000e+00 : f32
    %160 = vector.broadcast %cst_55 : f32 to vector<8x32xf32>
    %161 = arith.subf %160, %154 : vector<8x32xf32>
    %162 = arith.mulf %161, %159 : vector<8x32xf32>
    %163 = arith.mulf %154, %118 : vector<8x32xf32>
    %164 = arith.addf %162, %163 : vector<8x32xf32>
    %165 = vector.extract_strided_slice %125 {offsets = [0, 96], sizes = [8, 96], strides = [1, 1]} : vector<8x192xf32> to vector<8x96xf32>
    %166 = vector.extract_strided_slice %165 {offsets = [0, 0], sizes = [8, 32], strides = [1, 1]} : vector<8x96xf32> to vector<8x32xf32>
    %167 = vector.extract_strided_slice %137 {offsets = [0, 0], sizes = [8, 32], strides = [1, 1]} : vector<8x96xf32> to vector<8x32xf32>
    %168 = arith.addf %166, %167 : vector<8x32xf32>
    %169 = arith.negf %168 : vector<8x32xf32>
    %170 = math.exp %169 : vector<8x32xf32>
    %cst_56 = arith.constant 1.000000e+00 : f32
    %171 = vector.broadcast %cst_56 : f32 to vector<8x32xf32>
    %172 = arith.addf %171, %170 : vector<8x32xf32>
    %173 = arith.divf %171, %172 : vector<8x32xf32>
    %174 = vector.extract_strided_slice %165 {offsets = [0, 32], sizes = [8, 32], strides = [1, 1]} : vector<8x96xf32> to vector<8x32xf32>
    %175 = vector.extract_strided_slice %137 {offsets = [0, 32], sizes = [8, 32], strides = [1, 1]} : vector<8x96xf32> to vector<8x32xf32>
    %176 = arith.addf %174, %175 : vector<8x32xf32>
    %177 = arith.negf %176 : vector<8x32xf32>
    %178 = math.exp %177 : vector<8x32xf32>
    %cst_57 = arith.constant 1.000000e+00 : f32
    %179 = vector.broadcast %cst_57 : f32 to vector<8x32xf32>
    %180 = arith.addf %179, %178 : vector<8x32xf32>
    %181 = arith.divf %179, %180 : vector<8x32xf32>
    %182 = vector.extract_strided_slice %165 {offsets = [0, 64], sizes = [8, 32], strides = [1, 1]} : vector<8x96xf32> to vector<8x32xf32>
    %183 = vector.extract_strided_slice %137 {offsets = [0, 64], sizes = [8, 32], strides = [1, 1]} : vector<8x96xf32> to vector<8x32xf32>
    %184 = arith.mulf %173, %183 : vector<8x32xf32>
    %185 = arith.addf %182, %184 : vector<8x32xf32>
    %186 = math.tanh %185 : vector<8x32xf32>
    %cst_58 = arith.constant 1.000000e+00 : f32
    %187 = vector.broadcast %cst_58 : f32 to vector<8x32xf32>
    %188 = arith.subf %187, %181 : vector<8x32xf32>
    %189 = arith.mulf %188, %186 : vector<8x32xf32>
    %190 = arith.mulf %181, %119 : vector<8x32xf32>
    %191 = arith.addf %189, %190 : vector<8x32xf32>
    %192 = tpu.concatenate %164, %191 in 1 : vector<8x32xf32>, vector<8x32xf32> -> vector<8x64xf32>
    %c1_59 = arith.constant 1 : index
    %c0_60 = arith.constant 0 : index
    %c0_61 = arith.constant 0 : index
    %193 = vector.load %arg20[%c1_59, %c0_60, %c0_61] : memref<2x8x64xf32, #tpu.memory_space<vmem>>, vector<1x8x64xf32>
    %194 = vector.shape_cast %193 : vector<1x8x64xf32> to vector<8x64xf32>
    %195 = vector.shape_cast %192 : vector<8x64xf32> to vector<1x8x64xf32>
    tpu.vector_store %arg20[%c1_59, %c0_60, %c0_61], %195 {strides = array<i32>} : memref<2x8x64xf32, #tpu.memory_space<vmem>>, vector<1x8x64xf32>,
    %196 = arith.truncf %192 : vector<8x64xf32> to vector<8x64xbf16>
    %c0_62 = arith.constant 0 : index
    %c0_63 = arith.constant 0 : index
    %197 = vector.load %arg16[%c0_62, %c0_63] : memref<64x128xbf16, #tpu.memory_space<vmem>>, vector<64x128xbf16>
    %cst_64 = arith.constant dense<0.000000e+00> : vector<8x128xf32>
    %198 = tpu.matmul %196, %197, %cst_64 {dimension_numbers = #tpu.dot_dimension_numbers<[1], [0], [0], [1], [0, 0, 1, 1], [], []>} : vector<8x64xbf16>, vector<64x128xbf16>, vector<8x128xf32> -> vector<8x128xf32>
    %c0_65 = arith.constant 0 : index
    %c0_66 = arith.constant 0 : index
    %199 = vector.load %arg17[%c0_65, %c0_66] : memref<1x128xf32, #tpu.memory_space<vmem>>, vector<1x128xf32>
    %200 = vector.broadcast %199 : vector<1x128xf32> to vector<8x128xf32>
    %201 = arith.addf %198, %200 : vector<8x128xf32>
    %c0_67 = arith.constant 0 : index
    %c0_68 = arith.constant 0 : index
    %c0_69 = arith.constant 0 : index
    %202 = vector.load %arg18[%c0_67, %c0_68, %c0_69] : memref<1x8x128xf32, #tpu.memory_space<vmem>>, vector<1x8x128xf32>
    %203 = vector.shape_cast %202 : vector<1x8x128xf32> to vector<8x128xf32>
    %204 = vector.shape_cast %201 : vector<8x128xf32> to vector<1x8x128xf32>
    tpu.vector_store %arg18[%c0_67, %c0_68, %c0_69], %204 {strides = array<i32>} : memref<1x8x128xf32, #tpu.memory_space<vmem>>, vector<1x8x128xf32>,
    %c0_i32_70 = arith.constant 0 : i32
    %205 = arith.cmpi eq, %arg0, %c0_i32_70 : i32
    %206 = arith.extui %205 : i1 to i32
    %c0_i32_71 = arith.constant 0 : i32
    %207 = arith.cmpi ne, %206, %c0_i32_71 : i32
    scf.if %207 {
      %c0_72 = arith.constant 0 : index
      %c0_73 = arith.constant 0 : index
      %c0_74 = arith.constant 0 : index
      %208 = vector.load %arg20[%c0_72, %c0_73, %c0_74] : memref<2x8x64xf32, #tpu.memory_space<vmem>>, vector<2x8x64xf32>
      %c0_75 = arith.constant 0 : index
      %c0_76 = arith.constant 0 : index
      %c0_77 = arith.constant 0 : index
      %209 = vector.load %arg19[%c0_75, %c0_76, %c0_77] : memref<2x8x64xf32, #tpu.memory_space<vmem>>, vector<2x8x64xf32>
      tpu.vector_store %arg19[%c0_75, %c0_76, %c0_77], %208 {strides = array<i32>} : memref<2x8x64xf32, #tpu.memory_space<vmem>>, vector<2x8x64xf32>,
    } else {
    }
    return
  }
  func.func @transform_0(%arg0: i32, %arg1: memref<1x8xi32, #tpu.memory_space<smem>>) -> (i32, i32) {
    %c0_i32 = arith.constant 0 : i32
    %c0_i32_0 = arith.constant 0 : i32
    %c0_i32_1 = arith.constant 0 : i32
    return %c0_i32, %c0_i32_0 : i32, i32
  }
  func.func @transform_1(%arg0: i32, %arg1: memref<1x8xi32, #tpu.memory_space<smem>>) -> (i32, i32, i32) {
    %c0_i32 = arith.constant 0 : i32
    %c0_i32_0 = arith.constant 0 : i32
    %c0_i32_1 = arith.constant 0 : i32
    %c0_i32_2 = arith.constant 0 : i32
    return %c0_i32, %c0_i32_0, %c0_i32_1 : i32, i32, i32
  }
  func.func @transform_2(%arg0: i32, %arg1: memref<1x8xi32, #tpu.memory_space<smem>>) -> (i32, i32) {
    %c0_i32 = arith.constant 0 : i32
    %c0_i32_0 = arith.constant 0 : i32
    %c0_i32_1 = arith.constant 0 : i32
    return %c0_i32, %c0_i32_0 : i32, i32
  }
  func.func @transform_3(%arg0: i32, %arg1: memref<1x8xi32, #tpu.memory_space<smem>>) -> (i32, i32) {
    %c0_i32 = arith.constant 0 : i32
    %c0_i32_0 = arith.constant 0 : i32
    %c0_i32_1 = arith.constant 0 : i32
    return %c0_i32, %c0_i32_0 : i32, i32
  }
  func.func @transform_4(%arg0: i32, %arg1: memref<1x8xi32, #tpu.memory_space<smem>>) -> (i32, i32) {
    %c0_i32 = arith.constant 0 : i32
    %c0_i32_0 = arith.constant 0 : i32
    %c0_i32_1 = arith.constant 0 : i32
    return %c0_i32, %c0_i32_0 : i32, i32
  }
  func.func @transform_5(%arg0: i32, %arg1: memref<1x8xi32, #tpu.memory_space<smem>>) -> (i32, i32) {
    %c0_i32 = arith.constant 0 : i32
    %c0_i32_0 = arith.constant 0 : i32
    %c0_i32_1 = arith.constant 0 : i32
    return %c0_i32, %c0_i32_0 : i32, i32
  }
  func.func @transform_6(%arg0: i32, %arg1: memref<1x8xi32, #tpu.memory_space<smem>>) -> (i32, i32) {
    %c0_i32 = arith.constant 0 : i32
    %c0_i32_0 = arith.constant 0 : i32
    %c0_i32_1 = arith.constant 0 : i32
    return %c0_i32, %c0_i32_0 : i32, i32
  }
  func.func @transform_7(%arg0: i32, %arg1: memref<1x8xi32, #tpu.memory_space<smem>>) -> (i32, i32) {
    %c0_i32 = arith.constant 0 : i32
    %c0_i32_0 = arith.constant 0 : i32
    %c0_i32_1 = arith.constant 0 : i32
    return %c0_i32, %c0_i32_0 : i32, i32
  }
  func.func @transform_8(%arg0: i32, %arg1: memref<1x8xi32, #tpu.memory_space<smem>>) -> (i32, i32) {
    %c0_i32 = arith.constant 0 : i32
    %c0_i32_0 = arith.constant 0 : i32
    %c0_i32_1 = arith.constant 0 : i32
    return %c0_i32, %c0_i32_0 : i32, i32
  }
  func.func @transform_9(%arg0: i32, %arg1: memref<1x8xi32, #tpu.memory_space<smem>>) -> (i32, i32) {
    %c0_i32 = arith.constant 0 : i32
    %c0_i32_0 = arith.constant 0 : i32
    %c0_i32_1 = arith.constant 0 : i32
    return %c0_i32, %c0_i32_0 : i32, i32
  }
  func.func @transform_10(%arg0: i32, %arg1: memref<1x8xi32, #tpu.memory_space<smem>>) -> (i32, i32) {
    %c0_i32 = arith.constant 0 : i32
    %c0_i32_0 = arith.constant 0 : i32
    %c0_i32_1 = arith.constant 0 : i32
    return %c0_i32, %c0_i32_0 : i32, i32
  }
  func.func @transform_11(%arg0: i32, %arg1: memref<1x8xi32, #tpu.memory_space<smem>>) -> (i32, i32) {
    %c0_i32 = arith.constant 0 : i32
    %c0_i32_0 = arith.constant 0 : i32
    %c0_i32_1 = arith.constant 0 : i32
    return %c0_i32, %c0_i32_0 : i32, i32
  }
  func.func @transform_12(%arg0: i32, %arg1: memref<1x8xi32, #tpu.memory_space<smem>>) -> (i32, i32) {
    %c0_i32 = arith.constant 0 : i32
    %c0_i32_0 = arith.constant 0 : i32
    %c0_i32_1 = arith.constant 0 : i32
    return %c0_i32, %c0_i32_0 : i32, i32
  }
  func.func @transform_13(%arg0: i32, %arg1: memref<1x8xi32, #tpu.memory_space<smem>>) -> (i32, i32) {
    %c0_i32 = arith.constant 0 : i32
    %c0_i32_0 = arith.constant 0 : i32
    %c0_i32_1 = arith.constant 0 : i32
    return %c0_i32, %c0_i32_0 : i32, i32
  }
  func.func @transform_14(%arg0: i32, %arg1: memref<1x8xi32, #tpu.memory_space<smem>>) -> (i32, i32) {
    %c0_i32 = arith.constant 0 : i32
    %c0_i32_0 = arith.constant 0 : i32
    %c0_i32_1 = arith.constant 0 : i32
    return %c0_i32, %c0_i32_0 : i32, i32
  }
  func.func @transform_15(%arg0: i32, %arg1: memref<1x8xi32, #tpu.memory_space<smem>>) -> (i32, i32) {
    %c0_i32 = arith.constant 0 : i32
    %c0_i32_0 = arith.constant 0 : i32
    %c0_i32_1 = arith.constant 0 : i32
    return %c0_i32, %c0_i32_0 : i32, i32
  }
  func.func @transform_16(%arg0: i32, %arg1: memref<1x8xi32, #tpu.memory_space<smem>>) -> (i32, i32, i32) {
    %c0_i32 = arith.constant 0 : i32
    %c0_i32_0 = arith.constant 0 : i32
    %c0_i32_1 = arith.constant 0 : i32
    return %arg0, %c0_i32, %c0_i32_0 : i32, i32, i32
  }
  func.func @transform_17(%arg0: i32, %arg1: memref<1x8xi32, #tpu.memory_space<smem>>) -> (i32, i32, i32) {
    %c0_i32 = arith.constant 0 : i32
    %c0_i32_0 = arith.constant 0 : i32
    %c0_i32_1 = arith.constant 0 : i32
    %c0_i32_2 = arith.constant 0 : i32
    return %c0_i32, %c0_i32_0, %c0_i32_1 : i32, i32, i32
  }
}

</mosaic_0001>

<llo_original>
// kernel: decoder_forward.1
$region0: #{decoder_forward.1}
  #allocation0 [shape = 'u32[]', space=smem, size = 0x4, offset = 0x4, fixed_abs, tag = 'smem constant byte address 0x4 - core index']
  #allocation1 [shape = 'u32[144,128]{1,0:T(1,128)}', space=vmem, size = 0x12000, scoped, tag = 'internal scratch']
  #allocation2 [shape = 'f32[2,8,64]{2,1,0:T(8,128)}', space=vmem, size = 0x2000, scoped, tag = 'scratch operand']
  #allocation3 [shape = 's32[1]{0}', space=sflag, size = 0x4, scoped, tag = 'scoped memory for decoder_forward.1']
  #allocation4 [shape = 'u8[512]{0}', space=smem, size = 0x200, scoped, tag = 'prefetched SMEM operand 0']
  %s0 = inlined_call_operand.vmem [shape: s32[1,8], index: 0, kind: input, shape index: {}]
  %s1 = inlined_call_operand.vmem [shape: f32[128,80], index: 1, kind: input, shape index: {}]
  %s2 = inlined_call_operand.vmem [shape: f32[2,8,64], index: 2, kind: input, shape index: {}]
  %s3 = inlined_call_operand.vmem [shape: bf16[80,192], index: 3, kind: input, shape index: {}]
  %s4 = inlined_call_operand.vmem [shape: bf16[32,96], index: 4, kind: input, shape index: {}]
  %s5 = inlined_call_operand.vmem [shape: bf16[32,96], index: 5, kind: input, shape index: {}]
  %s6 = inlined_call_operand.vmem [shape: f32[1,192], index: 6, kind: input, shape index: {}]
  %s7 = inlined_call_operand.vmem [shape: f32[1,96], index: 7, kind: input, shape index: {}]
  %s8 = inlined_call_operand.vmem [shape: f32[1,96], index: 8, kind: input, shape index: {}]
  %s9 = inlined_call_operand.vmem [shape: bf16[64,192], index: 9, kind: input, shape index: {}]
  %s10 = inlined_call_operand.vmem [shape: bf16[32,96], index: 10, kind: input, shape index: {}]
  %s11 = inlined_call_operand.vmem [shape: bf16[32,96], index: 11, kind: input, shape index: {}]
  %s12 = inlined_call_operand.vmem [shape: f32[1,192], index: 12, kind: input, shape index: {}]
  %s13 = inlined_call_operand.vmem [shape: f32[1,96], index: 13, kind: input, shape index: {}]
  %s14 = inlined_call_operand.vmem [shape: f32[1,96], index: 14, kind: input, shape index: {}]
  %s15 = inlined_call_operand.vmem [shape: bf16[64,128], index: 15, kind: input, shape index: {}]
  %s16 = inlined_call_operand.vmem [shape: f32[1,128], index: 16, kind: input, shape index: {}]
  %s17 = inlined_call_operand.hbm [shape: f32[1,8,128], index: 17, kind: output, shape index: {0}]
  %s18 = inlined_call_operand.vmem [shape: f32[2,8,64], index: 18, kind: output, shape index: {1}]
  %19 = xla_tuple %s17, %s18
  %s20 = sld [smem:[#allocation0]]
  $region90: #{decoder_forward.1} parent=0
    _
  %s22 = ssub.s32 1, %s20
  %s23 = scalar_select 0, %s22, %s20
  %s24 = sshll.u32 %s0, 4
  %s25 = int_to_ptr.vmem [resolvable:$true] %s24
  %27 = dma.vmem_to_smem %s25, 16, [#allocation4], [#allocation3]
  %28 = dma.done [#allocation3], 16
  %29 = sfence
  $region1: #{decoder_forward.1} parent=0
    #allocation5 [shape = 'u8[4096]{0}', space=vmem, size = 0x1000, scoped, tag = 'output window, operand 0, single buffered']
    #allocation6 [shape = 's32[1]{0}', space=sflag, size = 0x4, scoped, tag = 'scoped memory for decoder_forward.1']
    %30 = vsyncpa [#allocation6], 0
    // Predicated region
    $region2: #{decoder_forward.1} parent=1 // pred_check
      _
    $region3: #{decoder_forward.1} parent=1 // pred_check_branch
      %32 = sbr.rel (0) target = $region5
    $region4: #{decoder_forward.1} parent=1 // pred_region
      _
    $region5: #{decoder_forward.1} parent=1 // pred_fallthru
      _
    // Predicated region
    $region6: #{decoder_forward.1} parent=1 // pred_check
      _
    $region7: #{decoder_forward.1} parent=1 // pred_check_branch
      %34 = sbr.rel (0) target = $region9
    $region8: #{decoder_forward.1} parent=1 // pred_region
      _
    $region9: #{decoder_forward.1} parent=1 // pred_fallthru
      _
    // Predicated region
    $region10: #{decoder_forward.1} parent=1 // pred_check
      _
    $region11: #{decoder_forward.1} parent=1 // pred_check_branch
      %36 = sbr.rel (0) target = $region13
    $region12: #{decoder_forward.1} parent=1 // pred_region
      _
    $region13: #{decoder_forward.1} parent=1 // pred_fallthru
      _
    // Predicated region
    $region14: #{decoder_forward.1} parent=1 // pred_check
      _
    $region15: #{decoder_forward.1} parent=1 // pred_check_branch
      %38 = sbr.rel (0) target = $region17
    $region16: #{decoder_forward.1} parent=1 // pred_region
      _
    $region17: #{decoder_forward.1} parent=1 // pred_fallthru
      _
    // Predicated region
    $region18: #{decoder_forward.1} parent=1 // pred_check
      _
    $region19: #{decoder_forward.1} parent=1 // pred_check_branch
      %40 = sbr.rel (0) target = $region21
    $region20: #{decoder_forward.1} parent=1 // pred_region
      _
    $region21: #{decoder_forward.1} parent=1 // pred_fallthru
      _
    // Predicated region
    $region22: #{decoder_forward.1} parent=1 // pred_check
      _
    $region23: #{decoder_forward.1} parent=1 // pred_check_branch
      %42 = sbr.rel (0) target = $region25
    $region24: #{decoder_forward.1} parent=1 // pred_region
      _
    $region25: #{decoder_forward.1} parent=1 // pred_fallthru
      _
    // Predicated region
    $region26: #{decoder_forward.1} parent=1 // pred_check
      _
    $region27: #{decoder_forward.1} parent=1 // pred_check_branch
      %44 = sbr.rel (0) target = $region29
    $region28: #{decoder_forward.1} parent=1 // pred_region
      _
    $region29: #{decoder_forward.1} parent=1 // pred_fallthru
      _
    // Predicated region
    $region30: #{decoder_forward.1} parent=1 // pred_check
      _
    $region31: #{decoder_forward.1} parent=1 // pred_check_branch
      %46 = sbr.rel (0) target = $region33
    $region32: #{decoder_forward.1} parent=1 // pred_region
      _
    $region33: #{decoder_forward.1} parent=1 // pred_fallthru
      _
    // Predicated region
    $region34: #{decoder_forward.1} parent=1 // pred_check
      _
    $region35: #{decoder_forward.1} parent=1 // pred_check_branch
      %48 = sbr.rel (0) target = $region37
    $region36: #{decoder_forward.1} parent=1 // pred_region
      _
    $region37: #{decoder_forward.1} parent=1 // pred_fallthru
      _
    // Predicated region
    $region38: #{decoder_forward.1} parent=1 // pred_check
      _
    $region39: #{decoder_forward.1} parent=1 // pred_check_branch
      %50 = sbr.rel (0) target = $region41
    $region40: #{decoder_forward.1} parent=1 // pred_region
      _
    $region41: #{decoder_forward.1} parent=1 // pred_fallthru
      _
    // Predicated region
    $region42: #{decoder_forward.1} parent=1 // pred_check
      _
    $region43: #{decoder_forward.1} parent=1 // pred_check_branch
      %52 = sbr.rel (0) target = $region45
    $region44: #{decoder_forward.1} parent=1 // pred_region
      _
    $region45: #{decoder_forward.1} parent=1 // pred_fallthru
      _
    // Predicated region
    $region46: #{decoder_forward.1} parent=1 // pred_check
      _
    $region47: #{decoder_forward.1} parent=1 // pred_check_branch
      %54 = sbr.rel (0) target = $region49
    $region48: #{decoder_forward.1} parent=1 // pred_region
      _
    $region49: #{decoder_forward.1} parent=1 // pred_fallthru
      _
    // Predicated region
    $region50: #{decoder_forward.1} parent=1 // pred_check
      _
    $region51: #{decoder_forward.1} parent=1 // pred_check_branch
      %56 = sbr.rel (0) target = $region53
    $region52: #{decoder_forward.1} parent=1 // pred_region
      _
    $region53: #{decoder_forward.1} parent=1 // pred_fallthru
      _
    // Predicated region
    $region54: #{decoder_forward.1} parent=1 // pred_check
      _
    $region55: #{decoder_forward.1} parent=1 // pred_check_branch
      %58 = sbr.rel (0) target = $region57
    $region56: #{decoder_forward.1} parent=1 // pred_region
      _
    $region57: #{decoder_forward.1} parent=1 // pred_fallthru
      _
    // Predicated region
    $region58: #{decoder_forward.1} parent=1 // pred_check
      _
    $region59: #{decoder_forward.1} parent=1 // pred_check_branch
      %60 = sbr.rel (0) target = $region61
    $region60: #{decoder_forward.1} parent=1 // pred_region
      _
    $region61: #{decoder_forward.1} parent=1 // pred_fallthru
      _
    // Predicated region
    $region62: #{decoder_forward.1} parent=1 // pred_check
      _
    $region63: #{decoder_forward.1} parent=1 // pred_check_branch
      %62 = sbr.rel (0) target = $region65
    $region64: #{decoder_forward.1} parent=1 // pred_region
      _
    $region65: #{decoder_forward.1} parent=1 // pred_fallthru
      _
    %p64 = scmp.eq.s32.totalorder 0, 0
    // Predicated region
    $region66: #{decoder_forward.1} parent=1 // pred_check
      %p65 = pneg %p64
    $region67: #{decoder_forward.1} parent=1 // pred_check_branch
      %67 = sbr.rel (%p65) target = $region69
    $region68: #{decoder_forward.1} parent=1 // pred_region
      %v68 = vld [vmem:[%s2] sm:$0xff]
      %v69 = vld [vmem:[%s2 + $0x8] sm:$0xff]
      %vm70 = vcmask 523264
      %71 = vst.msk [vmem:[#allocation2] sm:$0xff] %vm70, %v68
      %72 = vst.msk [vmem:[#allocation2 + $0x8] sm:$0xff] %vm70, %v69
    $region69: #{decoder_forward.1} parent=1 // pred_fallthru
      _
    %s73 = smul.u32 0, 128
    %s74 = sld [smem:[#allocation4 + %s73]]
    %s75 = scalar_lea.vmem %s1, %s74
    %v76 = vld [vmem:[%s75] sm:$0x1]
    %s77 = sadd.s32 %s73, 1
    %s78 = sld [smem:[#allocation4 + %s77]]
    %s79 = scalar_lea.vmem %s1, %s78
    %v80 = vld [vmem:[%s79] sm:$0x1]
    %s81 = sadd.s32 %s73, 2
    %s82 = sld [smem:[#allocation4 + %s81]]
    %s83 = scalar_lea.vmem %s1, %s82
    %v84 = vld [vmem:[%s83] sm:$0x1]
    %s85 = sadd.s32 %s73, 3
    %s86 = sld [smem:[#allocation4 + %s85]]
    %s87 = scalar_lea.vmem %s1, %s86
    %v88 = vld [vmem:[%s87] sm:$0x1]
    %s89 = sadd.s32 %s73, 4
    %s90 = sld [smem:[#allocation4 + %s89]]
    %s91 = scalar_lea.vmem %s1, %s90
    %v92 = vld [vmem:[%s91] sm:$0x1]
    %s93 = sadd.s32 %s73, 5
    %s94 = sld [smem:[#allocation4 + %s93]]
    %s95 = scalar_lea.vmem %s1, %s94
    %v96 = vld [vmem:[%s95] sm:$0x1]
    %s97 = sadd.s32 %s73, 6
    %s98 = sld [smem:[#allocation4 + %s97]]
    %s99 = scalar_lea.vmem %s1, %s98
    %v100 = vld [vmem:[%s99] sm:$0x1]
    %s101 = sadd.s32 %s73, 7
    %s102 = sld [smem:[#allocation4 + %s101]]
    %s103 = scalar_lea.vmem %s1, %s102
    %v104 = vld [vmem:[%s103] sm:$0x1]
    %v106 = vrot.slane %v80, 7
    %v109 = vrot.slane %v84, 6
    %v112 = vrot.slane %v88, 5
    %v115 = vrot.slane %v92, 4
    %v118 = vrot.slane %v96, 3
    %v121 = vrot.slane %v100, 2
    %v124 = vrot.slane %v104, 1
    %vm126 = vcmask 1040384
    %v127 = vsel %vm126, %v76, %v106
    %vm128 = vcmask 1041408
    %v129 = vsel %vm128, %v127, %v109
    %vm130 = vcmask 1042432
    %v131 = vsel %vm130, %v129, %v112
    %vm132 = vcmask 1043456
    %v133 = vsel %vm132, %v131, %v115
    %vm134 = vcmask 1044480
    %v135 = vsel %vm134, %v133, %v118
    %vm136 = vcmask 1045504
    %v137 = vsel %vm136, %v135, %v121
    %vm138 = vcmask 1046528
    %v139 = vsel %vm138, %v137, %v124
    %v140 = vld [vmem:[#allocation2] sm:$0xff]
    %v141 = vpack.c.bf16 %v139, %v139
    %v142 = vld [vmem:[%s3] sm:$0xff]
    %v143 = vld [vmem:[%s3 + $0x8] sm:$0xff]
    %v144 = vld [vmem:[%s3 + $0x10] sm:$0xff]
    %v145 = vld [vmem:[%s3 + $0x18] sm:$0xff]
    %v146 = vld [vmem:[%s3 + $0x20] sm:$0xff]
    %v147 = vld [vmem:[%s3 + $0x28] sm:$0xff]
    %v148 = vld [vmem:[%s3 + $0x30] sm:$0xff]
    %v149 = vld [vmem:[%s3 + $0x38] sm:$0xff]
    %v150 = vld [vmem:[%s3 + $0x40] sm:$0xff]
    %v151 = vld [vmem:[%s3 + $0x48] sm:$0xff]
    %v152 = vld [vmem:[%s6] sm:$0x3]
    %v154 = vlaneseq
    %v155 = vshrl.u32 %v154, 7
    %v156 = vsub.s32 0, %v155
    %v157 = vrot.slane %v152, %v156
    %v158 = vlaneseq
    %v159 = vshrl.u32 %v158, 7
    %v160 = vsub.s32 1, %v159
    %v161 = vrot.slane %v152, %v160
    %v174 = vunpack.c.l.b16 %v142
    %v175 = vunpack.c.h.b16 %v142
    %v176 = vunpack.c.l.b16 %v143
    %v177 = vunpack.c.h.b16 %v143
    %v178 = vunpack.c.l.b16 %v144
    %v179 = vunpack.c.h.b16 %v144
    %v180 = vunpack.c.l.b16 %v145
    %v181 = vunpack.c.h.b16 %v145
    %v182 = vunpack.c.l.b16 %v146
    %v183 = vunpack.c.h.b16 %v146
    %v184 = vunpack.c.l.b16 %v147
    %v185 = vunpack.c.h.b16 %v147
    %v186 = vunpack.c.l.b16 %v148
    %v187 = vunpack.c.h.b16 %v148
    %v188 = vunpack.c.l.b16 %v149
    %v189 = vunpack.c.h.b16 %v149
    %v190 = vunpack.c.l.b16 %v150
    %v191 = vunpack.c.h.b16 %v150
    %v192 = vunpack.c.l.b16 %v151
    %v193 = vunpack.c.h.b16 %v151
    %v194 = vpack.c.b16 %v176, %v174
    %v195 = vpack.c.b16 %v177, %v175
    %v196 = vpack.c.b16 %v180, %v178
    %v197 = vpack.c.b16 %v181, %v179
    %v198 = vpack.c.b16 %v184, %v182
    %v199 = vpack.c.b16 %v185, %v183
    %v200 = vpack.c.b16 %v188, %v186
    %v201 = vpack.c.b16 %v189, %v187
    %v202 = vpack.c.b16 %v192, %v190
    %v203 = vpack.c.b16 %v193, %v191
    %vm214 = vcmask 654336
    %v216 = vsel %vm214, %v141, 0
    %218 = vmatprep.subr.bf16.mxu0 %v195
    %219 = vmatpush1.bf16.msra.mxu0 %v194
    %220 = vmatprep.subr.bf16.mxu0 %v197
    %221 = vmatpush1.bf16.msra.mxu0 %v196
    %222 = vmatprep.subr.bf16.mxu0 %v199
    %223 = vmatpush1.bf16.msra.mxu0 %v198
    %224 = vmatprep.subr.bf16.mxu0 %v201
    %225 = vmatpush1.bf16.msra.mxu0 %v200
    %226 = vmatprep.subr.bf16.mxu0 %v203
    %227 = vmatpush1.bf16.msra.mxu0 %v202
    %228 = vmatprep.subr.bf16.mxu0 0
    %229 = vmatpush1.bf16.msra.mxu0 0
    %230 = vmatprep.subr.bf16.mxu0 0
    %231 = vmatpush1.bf16.msra.mxu0 0
    %232 = vmatprep.subr.bf16.mxu0 0
    %233 = vmatpush1.bf16.msra.mxu0 0
    %234 = vmatprep.subr.bf16.mxu0 0
    %235 = vmatpush1.bf16.msra.mxu0 0
    %236 = vmatprep.subr.bf16.mxu0 0
    %237 = vmatpush1.bf16.msra.mxu0 0
    %238 = vmatprep.subr.bf16.mxu0 0
    %239 = vmatpush1.bf16.msra.mxu0 0
    %240 = vmatprep.subr.bf16.mxu0 0
    %241 = vmatpush1.bf16.msra.mxu0 0
    %242 = vmatprep.subr.bf16.mxu0 0
    %243 = vmatpush1.bf16.msra.mxu0 0
    %244 = vmatprep.subr.bf16.mxu0 0
    %245 = vmatpush1.bf16.msra.mxu0 0
    %246 = vmatprep.subr.bf16.mxu0 0
    %247 = vmatpush1.bf16.msra.mxu0 0
    %248 = vmatprep.subr.bf16.mxu0 0
    %249 = vmatpush1.bf16.msra.mxu0 0
    %250 = vmatprep.mubr.bf16.mxu0 0
    %251 = vmatmul.mubr.bf16.gmra.mrb[0].mxu0 %v216
    %v252 = vpop.f32.mrb[0].mxu0
    %v253 = vadd.f32 %v157, %v252
    %v254 = vpop.f32.mrb[0].mxu0
    %v255 = vadd.f32 %v161, %v254
    %v256 = vpop.f32.mrb[0].mxu0
    %v257 = vpop.f32.mrb[0].mxu0
    %258 = vdwg.mxu0
    %v259 = vpack.c.bf16 %v140, %v140
    %v260 = vld [vmem:[%s4] sm:$0xf]
    %v261 = vld [vmem:[%s4 + $0x4] sm:$0xf]
    %v262 = vld [vmem:[%s4 + $0x8] sm:$0xf]
    %v263 = vld [vmem:[%s4 + $0xc] sm:$0xf]
    %v264 = vld [vmem:[%s7] sm:$0x1]
    %v266 = vlaneseq
    %v267 = vshrl.u32 %v266, 7
    %v268 = vsub.s32 0, %v267
    %v269 = vrot.slane %v264, %v268
    %v275 = vunpack.c.l.b16 %v260
    %v276 = vunpack.c.l.b16 %v261
    %v277 = vunpack.c.l.b16 %v262
    %v278 = vunpack.c.l.b16 %v263
    %v279 = vpack.c.b16 %v276, %v275
    %v280 = vpack.c.b16 %v278, %v277
    %vm283 = vcmask 261120
    %v285 = vsel %vm283, %v259, 0
    %287 = vmatprep.subr.bf16.mxu0 0
    %288 = vmatpush1.bf16.msra.mxu0 %v279
    %289 = vmatprep.subr.bf16.mxu0 0
    %290 = vmatpush1.bf16.msra.mxu0 %v280
    %291 = vmatprep.subr.bf16.mxu0 0
    %292 = vmatpush1.bf16.msra.mxu0 0
    %293 = vmatprep.subr.bf16.mxu0 0
    %294 = vmatpush1.bf16.msra.mxu0 0
    %295 = vmatprep.subr.bf16.mxu0 0
    %296 = vmatpush1.bf16.msra.mxu0 0
    %297 = vmatprep.subr.bf16.mxu0 0
    %298 = vmatpush1.bf16.msra.mxu0 0
    %299 = vmatprep.subr.bf16.mxu0 0
    %300 = vmatpush1.bf16.msra.mxu0 0
    %301 = vmatprep.subr.bf16.mxu0 0
    %302 = vmatpush1.bf16.msra.mxu0 0
    %303 = vmatprep.subr.bf16.mxu0 0
    %304 = vmatpush1.bf16.msra.mxu0 0
    %305 = vmatprep.subr.bf16.mxu0 0
    %306 = vmatpush1.bf16.msra.mxu0 0
    %307 = vmatprep.subr.bf16.mxu0 0
    %308 = vmatpush1.bf16.msra.mxu0 0
    %309 = vmatprep.subr.bf16.mxu0 0
    %310 = vmatpush1.bf16.msra.mxu0 0
    %311 = vmatprep.subr.bf16.mxu0 0
    %312 = vmatpush1.bf16.msra.mxu0 0
    %313 = vmatprep.subr.bf16.mxu0 0
    %314 = vmatpush1.bf16.msra.mxu0 0
    %315 = vmatprep.subr.bf16.mxu0 0
    %316 = vmatpush1.bf16.msra.mxu0 0
    %317 = vmatprep.subr.bf16.mxu0 0
    %318 = vmatpush1.bf16.msra.mxu0 0
    %319 = vmatprep.mubr.bf16.mxu0 0
    %320 = vmatmul.mubr.bf16.gmra.mrb[0].mxu0 %v285
    %v321 = vpop.f32.mrb[0].mxu0
    %v322 = vadd.f32 %v269, %v321
    %v323 = vpop.f32.mrb[0].mxu0
    %v324 = vpop.f32.mrb[0].mxu0
    %v325 = vpop.f32.mrb[0].mxu0
    %326 = vdwg.mxu0
    %v327 = vld [vmem:[%s5] sm:$0xf]
    %v328 = vld [vmem:[%s5 + $0x4] sm:$0xf]
    %v329 = vld [vmem:[%s5 + $0x8] sm:$0xf]
    %v330 = vld [vmem:[%s5 + $0xc] sm:$0xf]
    %v331 = vld [vmem:[%s8] sm:$0x1]
    %v333 = vlaneseq
    %v334 = vshrl.u32 %v333, 7
    %v335 = vsub.s32 0, %v334
    %v336 = vrot.slane %v331, %v335
    %339 = vrot.lane.b32.xlu0 %v259, 96
    %v340 = vpop.permute.xlu0 %339
    %v345 = vunpack.c.l.b16 %v327
    %v346 = vunpack.c.l.b16 %v328
    %v347 = vunpack.c.l.b16 %v329
    %v348 = vunpack.c.l.b16 %v330
    %v349 = vpack.c.b16 %v346, %v345
    %v350 = vpack.c.b16 %v348, %v347
    %v354 = vsel %vm283, %v340, 0
    %356 = vmatprep.subr.bf16.mxu0 0
    %357 = vmatpush1.bf16.msra.mxu0 %v349
    %358 = vmatprep.subr.bf16.mxu0 0
    %359 = vmatpush1.bf16.msra.mxu0 %v350
    %360 = vmatprep.subr.bf16.mxu0 0
    %361 = vmatpush1.bf16.msra.mxu0 0
    %362 = vmatprep.subr.bf16.mxu0 0
    %363 = vmatpush1.bf16.msra.mxu0 0
    %364 = vmatprep.subr.bf16.mxu0 0
    %365 = vmatpush1.bf16.msra.mxu0 0
    %366 = vmatprep.subr.bf16.mxu0 0
    %367 = vmatpush1.bf16.msra.mxu0 0
    %368 = vmatprep.subr.bf16.mxu0 0
    %369 = vmatpush1.bf16.msra.mxu0 0
    %370 = vmatprep.subr.bf16.mxu0 0
    %371 = vmatpush1.bf16.msra.mxu0 0
    %372 = vmatprep.subr.bf16.mxu0 0
    %373 = vmatpush1.bf16.msra.mxu0 0
    %374 = vmatprep.subr.bf16.mxu0 0
    %375 = vmatpush1.bf16.msra.mxu0 0
    %376 = vmatprep.subr.bf16.mxu0 0
    %377 = vmatpush1.bf16.msra.mxu0 0
    %378 = vmatprep.subr.bf16.mxu0 0
    %379 = vmatpush1.bf16.msra.mxu0 0
    %380 = vmatprep.subr.bf16.mxu0 0
    %381 = vmatpush1.bf16.msra.mxu0 0
    %382 = vmatprep.subr.bf16.mxu0 0
    %383 = vmatpush1.bf16.msra.mxu0 0
    %384 = vmatprep.subr.bf16.mxu0 0
    %385 = vmatpush1.bf16.msra.mxu0 0
    %386 = vmatprep.subr.bf16.mxu0 0
    %387 = vmatpush1.bf16.msra.mxu0 0
    %388 = vmatprep.mubr.bf16.mxu0 0
    %389 = vmatmul.mubr.bf16.gmra.mrb[0].mxu0 %v354
    %v390 = vpop.f32.mrb[0].mxu0
    %v391 = vadd.f32 %v336, %v390
    %v392 = vpop.f32.mrb[0].mxu0
    %v393 = vpop.f32.mrb[0].mxu0
    %v394 = vpop.f32.mrb[0].mxu0
    %395 = vdwg.mxu0
    %v396 = vadd.f32 %v253, %v322
    %v397 = vxor.u32 %v396, 2147483648
    %v398 = vmul.f32 %v397, 1.442695
    %v399 = vpow.pop %v398
    %v400 = vadd.f32 %v399, 1.0
    %v401 = vrcp.pop %v400
    %v402 = vmul.f32 1.0, %v401
    %404 = vrot.lane.b32.xlu0 %v322, 64
    %v405 = vpop.permute.xlu0 %404
    %v407 = vmul.f32 %v402, %v405
    %409 = vrot.lane.b32.xlu0 %v407, 64
    %v410 = vpop.permute.xlu0 %409
    %v412 = vadd.f32 %v253, %v410
    %v413 = vtanh.pop %v412
    %v414 = vsub.f32 1.0, %v402
    %416 = vrot.lane.b32.xlu0 %v413, 96
    %v417 = vpop.permute.xlu0 %416
    %v419 = vmul.f32 %v414, %v417
    %421 = vrot.lane.b32.xlu0 %v140, 32
    %v422 = vpop.permute.xlu0 %421
    %v424 = vmul.f32 %v402, %v422
    %v425 = vadd.f32 %v419, %v424
    %427 = vrot.lane.b32.xlu0 %v391, 96
    %v428 = vpop.permute.xlu0 %427
    %v430 = vadd.f32 %v253, %v428
    %v431 = vxor.u32 %v430, 2147483648
    %v432 = vmul.f32 %v431, 1.442695
    %v433 = vpow.pop %v432
    %v434 = vadd.f32 %v433, 1.0
    %v435 = vrcp.pop %v434
    %v436 = vmul.f32 1.0, %v435
    %v437 = vadd.f32 %v255, %v428
    %v438 = vxor.u32 %v437, 2147483648
    %v439 = vmul.f32 %v438, 1.442695
    %v440 = vpow.pop %v439
    %v441 = vadd.f32 %v440, 1.0
    %v442 = vrcp.pop %v441
    %v443 = vmul.f32 1.0, %v442
    %444 = vrot.lane.b32.xlu0 %v391, 32
    %v445 = vpop.permute.xlu0 %444
    %v447 = vmul.f32 %v436, %v445
    %449 = vrot.lane.b32.xlu0 %v447, 64
    %v450 = vpop.permute.xlu0 %449
    %v452 = vadd.f32 %v255, %v450
    %v453 = vtanh.pop %v452
    %v454 = vsub.f32 1.0, %v443
    %456 = vrot.lane.b32.xlu0 %v453, 96
    %v457 = vpop.permute.xlu0 %456
    %v459 = vmul.f32 %v454, %v457
    %460 = vrot.lane.b32.xlu0 %v140, 96
    %v461 = vpop.permute.xlu0 %460
    %v463 = vmul.f32 %v443, %v461
    %v464 = vadd.f32 %v459, %v463
    %466 = vrot.lane.b32.xlu0 %v425, 96
    %v467 = vpop.permute.xlu0 %466
    %470 = vrot.lane.b32.xlu0 %v464, 32
    %v471 = vpop.permute.xlu0 %470
    %v473 = vsel %vm283, %v467, %v471
    %vm474 = vcmask 523264
    %475 = vst.msk [vmem:[#allocation2] sm:$0xff] %vm474, %v473
    %s476 = scalar_lea.vmem [#allocation2], 8
    %v477 = vld [vmem:[%s476] sm:$0xff]
    %v478 = vpack.c.bf16 %v473, %v473
    %v479 = vld [vmem:[%s9] sm:$0xff]
    %v480 = vld [vmem:[%s9 + $0x8] sm:$0xff]
    %v481 = vld [vmem:[%s9 + $0x10] sm:$0xff]
    %v482 = vld [vmem:[%s9 + $0x18] sm:$0xff]
    %v483 = vld [vmem:[%s9 + $0x20] sm:$0xff]
    %v484 = vld [vmem:[%s9 + $0x28] sm:$0xff]
    %v485 = vld [vmem:[%s9 + $0x30] sm:$0xff]
    %v486 = vld [vmem:[%s9 + $0x38] sm:$0xff]
    %v487 = vld [vmem:[%s12] sm:$0x3]
    %v489 = vlaneseq
    %v490 = vshrl.u32 %v489, 7
    %v491 = vsub.s32 0, %v490
    %v492 = vrot.slane %v487, %v491
    %v493 = vlaneseq
    %v494 = vshrl.u32 %v493, 7
    %v495 = vsub.s32 1, %v494
    %v496 = vrot.slane %v487, %v495
    %v507 = vunpack.c.l.b16 %v479
    %v508 = vunpack.c.h.b16 %v479
    %v509 = vunpack.c.l.b16 %v480
    %v510 = vunpack.c.h.b16 %v480
    %v511 = vunpack.c.l.b16 %v481
    %v512 = vunpack.c.h.b16 %v481
    %v513 = vunpack.c.l.b16 %v482
    %v514 = vunpack.c.h.b16 %v482
    %v515 = vunpack.c.l.b16 %v483
    %v516 = vunpack.c.h.b16 %v483
    %v517 = vunpack.c.l.b16 %v484
    %v518 = vunpack.c.h.b16 %v484
    %v519 = vunpack.c.l.b16 %v485
    %v520 = vunpack.c.h.b16 %v485
    %v521 = vunpack.c.l.b16 %v486
    %v522 = vunpack.c.h.b16 %v486
    %v523 = vpack.c.b16 %v509, %v507
    %v524 = vpack.c.b16 %v510, %v508
    %v525 = vpack.c.b16 %v513, %v511
    %v526 = vpack.c.b16 %v514, %v512
    %v527 = vpack.c.b16 %v517, %v515
    %v528 = vpack.c.b16 %v518, %v516
    %v529 = vpack.c.b16 %v521, %v519
    %v530 = vpack.c.b16 %v522, %v520
    %v540 = vsel %vm474, %v478, 0
    %542 = vmatprep.subr.bf16.mxu0 %v524
    %543 = vmatpush1.bf16.msra.mxu0 %v523
    %544 = vmatprep.subr.bf16.mxu0 %v526
    %545 = vmatpush1.bf16.msra.mxu0 %v525
    %546 = vmatprep.subr.bf16.mxu0 %v528
    %547 = vmatpush1.bf16.msra.mxu0 %v527
    %548 = vmatprep.subr.bf16.mxu0 %v530
    %549 = vmatpush1.bf16.msra.mxu0 %v529
    %550 = vmatprep.subr.bf16.mxu0 0
    %551 = vmatpush1.bf16.msra.mxu0 0
    %552 = vmatprep.subr.bf16.mxu0 0
    %553 = vmatpush1.bf16.msra.mxu0 0
    %554 = vmatprep.subr.bf16.mxu0 0
    %555 = vmatpush1.bf16.msra.mxu0 0
    %556 = vmatprep.subr.bf16.mxu0 0
    %557 = vmatpush1.bf16.msra.mxu0 0
    %558 = vmatprep.subr.bf16.mxu0 0
    %559 = vmatpush1.bf16.msra.mxu0 0
    %560 = vmatprep.subr.bf16.mxu0 0
    %561 = vmatpush1.bf16.msra.mxu0 0
    %562 = vmatprep.subr.bf16.mxu0 0
    %563 = vmatpush1.bf16.msra.mxu0 0
    %564 = vmatprep.subr.bf16.mxu0 0
    %565 = vmatpush1.bf16.msra.mxu0 0
    %566 = vmatprep.subr.bf16.mxu0 0
    %567 = vmatpush1.bf16.msra.mxu0 0
    %568 = vmatprep.subr.bf16.mxu0 0
    %569 = vmatpush1.bf16.msra.mxu0 0
    %570 = vmatprep.subr.bf16.mxu0 0
    %571 = vmatpush1.bf16.msra.mxu0 0
    %572 = vmatprep.subr.bf16.mxu0 0
    %573 = vmatpush1.bf16.msra.mxu0 0
    %574 = vmatprep.mubr.bf16.mxu0 0
    %575 = vmatmul.mubr.bf16.gmra.mrb[0].mxu0 %v540
    %v576 = vpop.f32.mrb[0].mxu0
    %v577 = vadd.f32 %v492, %v576
    %v578 = vpop.f32.mrb[0].mxu0
    %v579 = vadd.f32 %v496, %v578
    %v580 = vpop.f32.mrb[0].mxu0
    %v581 = vpop.f32.mrb[0].mxu0
    %582 = vdwg.mxu0
    %v583 = vpack.c.bf16 %v477, %v477
    %v584 = vld [vmem:[%s10] sm:$0xf]
    %v585 = vld [vmem:[%s10 + $0x4] sm:$0xf]
    %v586 = vld [vmem:[%s10 + $0x8] sm:$0xf]
    %v587 = vld [vmem:[%s10 + $0xc] sm:$0xf]
    %v588 = vld [vmem:[%s13] sm:$0x1]
    %v590 = vlaneseq
    %v591 = vshrl.u32 %v590, 7
    %v592 = vsub.s32 0, %v591
    %v593 = vrot.slane %v588, %v592
    %v599 = vunpack.c.l.b16 %v584
    %v600 = vunpack.c.l.b16 %v585
    %v601 = vunpack.c.l.b16 %v586
    %v602 = vunpack.c.l.b16 %v587
    %v603 = vpack.c.b16 %v600, %v599
    %v604 = vpack.c.b16 %v602, %v601
    %v608 = vsel %vm283, %v583, 0
    %610 = vmatprep.subr.bf16.mxu0 0
    %611 = vmatpush1.bf16.msra.mxu0 %v603
    %612 = vmatprep.subr.bf16.mxu0 0
    %613 = vmatpush1.bf16.msra.mxu0 %v604
    %614 = vmatprep.subr.bf16.mxu0 0
    %615 = vmatpush1.bf16.msra.mxu0 0
    %616 = vmatprep.subr.bf16.mxu0 0
    %617 = vmatpush1.bf16.msra.mxu0 0
    %618 = vmatprep.subr.bf16.mxu0 0
    %619 = vmatpush1.bf16.msra.mxu0 0
    %620 = vmatprep.subr.bf16.mxu0 0
    %621 = vmatpush1.bf16.msra.mxu0 0
    %622 = vmatprep.subr.bf16.mxu0 0
    %623 = vmatpush1.bf16.msra.mxu0 0
    %624 = vmatprep.subr.bf16.mxu0 0
    %625 = vmatpush1.bf16.msra.mxu0 0
    %626 = vmatprep.subr.bf16.mxu0 0
    %627 = vmatpush1.bf16.msra.mxu0 0
    %628 = vmatprep.subr.bf16.mxu0 0
    %629 = vmatpush1.bf16.msra.mxu0 0
    %630 = vmatprep.subr.bf16.mxu0 0
    %631 = vmatpush1.bf16.msra.mxu0 0
    %632 = vmatprep.subr.bf16.mxu0 0
    %633 = vmatpush1.bf16.msra.mxu0 0
    %634 = vmatprep.subr.bf16.mxu0 0
    %635 = vmatpush1.bf16.msra.mxu0 0
    %636 = vmatprep.subr.bf16.mxu0 0
    %637 = vmatpush1.bf16.msra.mxu0 0
    %638 = vmatprep.subr.bf16.mxu0 0
    %639 = vmatpush1.bf16.msra.mxu0 0
    %640 = vmatprep.subr.bf16.mxu0 0
    %641 = vmatpush1.bf16.msra.mxu0 0
    %642 = vmatprep.mubr.bf16.mxu0 0
    %643 = vmatmul.mubr.bf16.gmra.mrb[0].mxu0 %v608
    %v644 = vpop.f32.mrb[0].mxu0
    %v645 = vadd.f32 %v593, %v644
    %v646 = vpop.f32.mrb[0].mxu0
    %v647 = vpop.f32.mrb[0].mxu0
    %v648 = vpop.f32.mrb[0].mxu0
    %649 = vdwg.mxu0
    %v650 = vld [vmem:[%s11] sm:$0xf]
    %v651 = vld [vmem:[%s11 + $0x4] sm:$0xf]
    %v652 = vld [vmem:[%s11 + $0x8] sm:$0xf]
    %v653 = vld [vmem:[%s11 + $0xc] sm:$0xf]
    %v654 = vld [vmem:[%s14] sm:$0x1]
    %v656 = vlaneseq
    %v657 = vshrl.u32 %v656, 7
    %v658 = vsub.s32 0, %v657
    %v659 = vrot.slane %v654, %v658
    %662 = vrot.lane.b32.xlu0 %v583, 96
    %v663 = vpop.permute.xlu0 %662
    %v668 = vunpack.c.l.b16 %v650
    %v669 = vunpack.c.l.b16 %v651
    %v670 = vunpack.c.l.b16 %v652
    %v671 = vunpack.c.l.b16 %v653
    %v672 = vpack.c.b16 %v669, %v668
    %v673 = vpack.c.b16 %v671, %v670
    %v677 = vsel %vm283, %v663, 0
    %679 = vmatprep.subr.bf16.mxu0 0
    %680 = vmatpush1.bf16.msra.mxu0 %v672
    %681 = vmatprep.subr.bf16.mxu0 0
    %682 = vmatpush1.bf16.msra.mxu0 %v673
    %683 = vmatprep.subr.bf16.mxu0 0
    %684 = vmatpush1.bf16.msra.mxu0 0
    %685 = vmatprep.subr.bf16.mxu0 0
    %686 = vmatpush1.bf16.msra.mxu0 0
    %687 = vmatprep.subr.bf16.mxu0 0
    %688 = vmatpush1.bf16.msra.mxu0 0
    %689 = vmatprep.subr.bf16.mxu0 0
    %690 = vmatpush1.bf16.msra.mxu0 0
    %691 = vmatprep.subr.bf16.mxu0 0
    %692 = vmatpush1.bf16.msra.mxu0 0
    %693 = vmatprep.subr.bf16.mxu0 0
    %694 = vmatpush1.bf16.msra.mxu0 0
    %695 = vmatprep.subr.bf16.mxu0 0
    %696 = vmatpush1.bf16.msra.mxu0 0
    %697 = vmatprep.subr.bf16.mxu0 0
    %698 = vmatpush1.bf16.msra.mxu0 0
    %699 = vmatprep.subr.bf16.mxu0 0
    %700 = vmatpush1.bf16.msra.mxu0 0
    %701 = vmatprep.subr.bf16.mxu0 0
    %702 = vmatpush1.bf16.msra.mxu0 0
    %703 = vmatprep.subr.bf16.mxu0 0
    %704 = vmatpush1.bf16.msra.mxu0 0
    %705 = vmatprep.subr.bf16.mxu0 0
    %706 = vmatpush1.bf16.msra.mxu0 0
    %707 = vmatprep.subr.bf16.mxu0 0
    %708 = vmatpush1.bf16.msra.mxu0 0
    %709 = vmatprep.subr.bf16.mxu0 0
    %710 = vmatpush1.bf16.msra.mxu0 0
    %711 = vmatprep.mubr.bf16.mxu0 0
    %712 = vmatmul.mubr.bf16.gmra.mrb[0].mxu0 %v677
    %v713 = vpop.f32.mrb[0].mxu0
    %v714 = vadd.f32 %v659, %v713
    %v715 = vpop.f32.mrb[0].mxu0
    %v716 = vpop.f32.mrb[0].mxu0
    %v717 = vpop.f32.mrb[0].mxu0
    %718 = vdwg.mxu0
    %v719 = vadd.f32 %v577, %v645
    %v720 = vxor.u32 %v719, 2147483648
    %v721 = vmul.f32 %v720, 1.442695
    %v722 = vpow.pop %v721
    %v723 = vadd.f32 %v722, 1.0
    %v724 = vrcp.pop %v723
    %v725 = vmul.f32 1.0, %v724
    %727 = vrot.lane.b32.xlu0 %v645, 64
    %v728 = vpop.permute.xlu0 %727
    %v730 = vmul.f32 %v725, %v728
    %732 = vrot.lane.b32.xlu0 %v730, 64
    %v733 = vpop.permute.xlu0 %732
    %v735 = vadd.f32 %v577, %v733
    %v736 = vtanh.pop %v735
    %v737 = vsub.f32 1.0, %v725
    %739 = vrot.lane.b32.xlu0 %v736, 96
    %v740 = vpop.permute.xlu0 %739
    %v742 = vmul.f32 %v737, %v740
    %744 = vrot.lane.b32.xlu0 %v477, 32
    %v745 = vpop.permute.xlu0 %744
    %v747 = vmul.f32 %v725, %v745
    %v748 = vadd.f32 %v742, %v747
    %750 = vrot.lane.b32.xlu0 %v714, 96
    %v751 = vpop.permute.xlu0 %750
    %v753 = vadd.f32 %v577, %v751
    %v754 = vxor.u32 %v753, 2147483648
    %v755 = vmul.f32 %v754, 1.442695
    %v756 = vpow.pop %v755
    %v757 = vadd.f32 %v756, 1.0
    %v758 = vrcp.pop %v757
    %v759 = vmul.f32 1.0, %v758
    %v760 = vadd.f32 %v579, %v751
    %v761 = vxor.u32 %v760, 2147483648
    %v762 = vmul.f32 %v761, 1.442695
    %v763 = vpow.pop %v762
    %v764 = vadd.f32 %v763, 1.0
    %v765 = vrcp.pop %v764
    %v766 = vmul.f32 1.0, %v765
    %767 = vrot.lane.b32.xlu0 %v714, 32
    %v768 = vpop.permute.xlu0 %767
    %v770 = vmul.f32 %v759, %v768
    %772 = vrot.lane.b32.xlu0 %v770, 64
    %v773 = vpop.permute.xlu0 %772
    %v775 = vadd.f32 %v579, %v773
    %v776 = vtanh.pop %v775
    %v777 = vsub.f32 1.0, %v766
    %779 = vrot.lane.b32.xlu0 %v776, 96
    %v780 = vpop.permute.xlu0 %779
    %v782 = vmul.f32 %v777, %v780
    %783 = vrot.lane.b32.xlu0 %v477, 96
    %v784 = vpop.permute.xlu0 %783
    %v786 = vmul.f32 %v766, %v784
    %v787 = vadd.f32 %v782, %v786
    %789 = vrot.lane.b32.xlu0 %v748, 96
    %v790 = vpop.permute.xlu0 %789
    %793 = vrot.lane.b32.xlu0 %v787, 32
    %v794 = vpop.permute.xlu0 %793
    %v796 = vsel %vm283, %v790, %v794
    %797 = vst.msk [vmem:[%s476] sm:$0xff] %vm474, %v796
    %v798 = vpack.c.bf16 %v796, %v796
    %v799 = vld [vmem:[%s15] sm:$0xf]
    %v800 = vld [vmem:[%s15 + $0x4] sm:$0xf]
    %v801 = vld [vmem:[%s15 + $0x8] sm:$0xf]
    %v802 = vld [vmem:[%s15 + $0xc] sm:$0xf]
    %v803 = vld [vmem:[%s15 + $0x10] sm:$0xf]
    %v804 = vld [vmem:[%s15 + $0x14] sm:$0xf]
    %v805 = vld [vmem:[%s15 + $0x18] sm:$0xf]
    %v806 = vld [vmem:[%s15 + $0x1c] sm:$0xf]
    %v807 = vld [vmem:[%s16] sm:$0x1]
    %v809 = vlaneseq
    %v810 = vshrl.u32 %v809, 7
    %v811 = vsub.s32 0, %v810
    %v812 = vrot.slane %v807, %v811
    %v822 = vunpack.c.l.b16 %v799
    %v823 = vunpack.c.l.b16 %v800
    %v824 = vunpack.c.l.b16 %v801
    %v825 = vunpack.c.l.b16 %v802
    %v826 = vunpack.c.l.b16 %v803
    %v827 = vunpack.c.l.b16 %v804
    %v828 = vunpack.c.l.b16 %v805
    %v829 = vunpack.c.l.b16 %v806
    %v830 = vpack.c.b16 %v823, %v822
    %v831 = vpack.c.b16 %v825, %v824
    %v832 = vpack.c.b16 %v827, %v826
    %v833 = vpack.c.b16 %v829, %v828
    %v839 = vsel %vm474, %v798, 0
    %841 = vmatprep.subr.bf16.mxu0 0
    %842 = vmatpush1.bf16.msra.mxu0 %v830
    %843 = vmatprep.subr.bf16.mxu0 0
    %844 = vmatpush1.bf16.msra.mxu0 %v831
    %845 = vmatprep.subr.bf16.mxu0 0
    %846 = vmatpush1.bf16.msra.mxu0 %v832
    %847 = vmatprep.subr.bf16.mxu0 0
    %848 = vmatpush1.bf16.msra.mxu0 %v833
    %849 = vmatprep.subr.bf16.mxu0 0
    %850 = vmatpush1.bf16.msra.mxu0 0
    %851 = vmatprep.subr.bf16.mxu0 0
    %852 = vmatpush1.bf16.msra.mxu0 0
    %853 = vmatprep.subr.bf16.mxu0 0
    %854 = vmatpush1.bf16.msra.mxu0 0
    %855 = vmatprep.subr.bf16.mxu0 0
    %856 = vmatpush1.bf16.msra.mxu0 0
    %857 = vmatprep.subr.bf16.mxu0 0
    %858 = vmatpush1.bf16.msra.mxu0 0
    %859 = vmatprep.subr.bf16.mxu0 0
    %860 = vmatpush1.bf16.msra.mxu0 0
    %861 = vmatprep.subr.bf16.mxu0 0
    %862 = vmatpush1.bf16.msra.mxu0 0
    %863 = vmatprep.subr.bf16.mxu0 0
    %864 = vmatpush1.bf16.msra.mxu0 0
    %865 = vmatprep.subr.bf16.mxu0 0
    %866 = vmatpush1.bf16.msra.mxu0 0
    %867 = vmatprep.subr.bf16.mxu0 0
    %868 = vmatpush1.bf16.msra.mxu0 0
    %869 = vmatprep.subr.bf16.mxu0 0
    %870 = vmatpush1.bf16.msra.mxu0 0
    %871 = vmatprep.subr.bf16.mxu0 0
    %872 = vmatpush1.bf16.msra.mxu0 0
    %873 = vmatprep.mubr.bf16.mxu0 0
    %874 = vmatmul.mubr.bf16.gmra.mrb[0].mxu0 %v839
    %v875 = vpop.f32.mrb[0].mxu0
    %v876 = vadd.f32 %v812, %v875
    %v877 = vpop.f32.mrb[0].mxu0
    %v878 = vpop.f32.mrb[0].mxu0
    %v879 = vpop.f32.mrb[0].mxu0
    %880 = vdwg.mxu0
    %881 = vst [vmem:[#allocation5] sm:$0xff] %v876
    // Predicated region
    $region70: #{decoder_forward.1} parent=1 // pred_check
      %p882 = pneg %p64
    $region71: #{decoder_forward.1} parent=1 // pred_check_branch
      %884 = sbr.rel (%p882) target = $region73
    $region72: #{decoder_forward.1} parent=1 // pred_region
      %v885 = vld [vmem:[#allocation2] sm:$0xff]
      %v886 = vld [vmem:[#allocation2 + $0x8] sm:$0xff]
      %887 = vst.msk [vmem:[%s18] sm:$0xff] %vm474, %v885
      %888 = vst.msk [vmem:[%s18 + $0x8] sm:$0xff] %vm474, %v886
    $region73: #{decoder_forward.1} parent=1 // pred_fallthru
      _
    // Predicated region
    $region74: #{decoder_forward.1} parent=1 // pred_check
      _
    $region75: #{decoder_forward.1} parent=1 // pred_check_branch
      %890 = sbr.rel (0) target = $region77
    $region76: #{decoder_forward.1} parent=1 // pred_region
      %s892 = ssub.s32 128, 128
      %893 = vsyncadd [#allocation6], %s892
      %s895 = sshll.u32 [#allocation5], 4
      %s896 = int_to_ptr.vmem [resolvable:$true] %s895
      %898 = dma.vmem_to_hbm [thread:$0]  %s896, 128, %s17, [#allocation6]
    $region77: #{decoder_forward.1} parent=1 // pred_fallthru
      _
    // Predicated region
    $region78: #{decoder_forward.1} parent=1 // pred_check
      _
    $region79: #{decoder_forward.1} parent=1 // pred_check_branch
      %900 = sbr.rel (0) target = $region81
    $region80: #{decoder_forward.1} parent=1 // pred_region
      _
    $region81: #{decoder_forward.1} parent=1 // pred_fallthru
      _
    // Predicated region
    $region82: #{decoder_forward.1} parent=1 // pred_check
      _
    $region83: #{decoder_forward.1} parent=1 // pred_check_branch
      %902 = sbr.rel (0) target = $region85
    $region84: #{decoder_forward.1} parent=1 // pred_region
      %903 = dma.done [#allocation6], 128
    $region85: #{decoder_forward.1} parent=1 // pred_fallthru
      _
    // Predicated region
    $region86: #{decoder_forward.1} parent=1 // pred_check
      _
    $region87: #{decoder_forward.1} parent=1 // pred_check_branch
      %905 = sbr.rel (0) target = $region89
    $region88: #{decoder_forward.1} parent=1 // pred_region
      _
    $region89: #{decoder_forward.1} parent=1 // pred_fallthru
      _
    %906 = vsyncpa [#allocation6], 1

</llo_original>
